<compile_context>
chip_gen: v6e
topology: v6e:2x2x1
jax: 0.10.0
libtpu: 0.0.40
codegen_flags: <defaults>
</compile_context>

<pallas_src>
import functools

import jax
import jax.numpy as jnp
from jax import lax
from jax.experimental import pallas as pl
from jax.experimental.pallas import tpu as pltpu

LANE = 128


def _round_up(x, m):
    return (x + m - 1) // m * m


def _choose_tm(m):
    for tm in (512, 256, 128, 64, 32, 16, 8):
        if m % tm == 0:
            return tm
    raise ValueError("N*H*W must be a multiple of 8 (sublane alignment), got %d" % m)


def _silu(y):
    # y * sigmoid(y); the divide goes to the EUP via the approximate reciprocal.
    return y * pl.reciprocal(1.0 + jnp.exp(-y), approx=True)


# ----------------------- fused 1x1 conv + BN + SiLU (matmul) -----------------------
def _mm_bn_silu_kernel(x_ref, w_ref, sb_ref, o_ref):
    # x_ref: (TM, Cin)  w_ref: (Cin, Cout) bf16  sb_ref: (2, Cout) f32 [scale; bias]
    y = jnp.dot(x_ref[...].astype(jnp.bfloat16), w_ref[...],
                preferred_element_type=jnp.float32)
    y = y * sb_ref[0:1, :] + sb_ref[1:2, :]          # folded BatchNorm (eval mode)
    o_ref[...] = _silu(y).astype(o_ref.dtype)


def conv1x1_bn_silu(x2d, w_bf16, sb, *, out_dtype):
    m, cin = x2d.shape
    cout = w_bf16.shape[1]
    tm = _choose_tm(m)
    return pl.pallas_call(
        _mm_bn_silu_kernel,
        out_shape=jax.ShapeDtypeStruct((m, cout), out_dtype),
        grid_spec=pltpu.PrefetchScalarGridSpec(
            num_scalar_prefetch=0,
            grid=(m // tm,),
            in_specs=[
                pl.BlockSpec((tm, cin), lambda i: (i, 0)),
                pl.BlockSpec((cin, cout), lambda i: (0, 0)),
                pl.BlockSpec((2, cout), lambda i: (0, 0)),
            ],
            out_specs=pl.BlockSpec((tm, cout), lambda i: (i, 0)),
        ),
        compiler_params=pltpu.CompilerParams(dimension_semantics=("parallel",)),
    )(x2d, w_bf16, sb)


# ------------- fused Bottleneck: 1x1 conv -> 3x3 conv -> residual add --------------
def _bottleneck_kernel(x_ref, w1_ref, sb1_ref, w2_ref, sb2_ref, o_ref, pad_ref, *, H, W):
    hp = w1_ref.shape[0]
    x = x_ref[0]                                          # (H, W, hp) bf16
    x2d = x.reshape(H * W, hp)

    # 1x1 conv + BN + SiLU (hp -> hp)
    y = jnp.dot(x2d.astype(jnp.bfloat16), w1_ref[...],
                preferred_element_type=jnp.float32)
    y = y * sb1_ref[0:1, :] + sb1_ref[1:2, :]
    b1 = _silu(y).astype(jnp.bfloat16)

    # zero-padded copy in VMEM (no HBM round-trip for the padding)
    pad_ref[...] = jnp.zeros_like(pad_ref)
    pad_ref[1:H + 1, 1:W + 1, :] = b1.reshape(H, W, hp)

    # 3x3 conv as 9 shifted matmuls, f32 accumulation on the MXU
    acc = jnp.zeros((H * W, hp), jnp.float32)
    for dh in range(3):
        for dw in range(3):
            win = pad_ref[dh:dh + H, dw:dw + W, :].reshape(H * W, hp)
            acc += jnp.dot(win, w2_ref[dh * 3 + dw],
                           preferred_element_type=jnp.float32)

    z = acc * sb2_ref[0:1, :] + sb2_ref[1:2, :]
    z = _silu(z) + x2d.astype(jnp.float32)                # shortcut add
    o_ref[0] = z.reshape(H, W, hp).astype(o_ref.dtype)


def bottleneck_fused(x_img, c_block, w1, sb1, w2, sb2):
    n, h, w, c = x_img.shape
    hp = w1.shape[0]
    assert c % hp == 0
    kern = functools.partial(_bottleneck_kernel, H=h, W=w)
    return pl.pallas_call(
        kern,
        out_shape=jax.ShapeDtypeStruct((n, h, w, hp), jnp.bfloat16),
        grid_spec=pltpu.PrefetchScalarGridSpec(
            num_scalar_prefetch=0,
            grid=(n,),
            in_specs=[
                pl.BlockSpec((1, h, w, hp), lambda b: (b, 0, 0, c_block)),
                pl.BlockSpec((hp, hp), lambda b: (0, 0)),
                pl.BlockSpec((2, hp), lambda b: (0, 0)),
                pl.BlockSpec((9, hp, hp), lambda b: (0, 0, 0)),
                pl.BlockSpec((2, hp), lambda b: (0, 0)),
            ],
            out_specs=pl.BlockSpec((1, h, w, hp), lambda b: (b, 0, 0, 0)),
            scratch_shapes=[pltpu.VMEM((h + 2, w + 2, hp), jnp.bfloat16)],
        ),
        compiler_params=pltpu.CompilerParams(dimension_semantics=("parallel",)),
    )(x_img, w1, sb1, w2, sb2)


# -------------- conv3 with the channel-concat fused via split weights --------------
def _concat_mm_bn_silu_kernel(a_ref, b_ref, wa_ref, wb_ref, sb_ref, o_ref):
    y = jnp.dot(a_ref[...].astype(jnp.bfloat16), wa_ref[...],
                preferred_element_type=jnp.float32)
    y = y + jnp.dot(b_ref[...].astype(jnp.bfloat16), wb_ref[...],
                    preferred_element_type=jnp.float32)
    y = y * sb_ref[0:1, :] + sb_ref[1:2, :]
    o_ref[...] = _silu(y).astype(o_ref.dtype)


def conv3_concat_fused(x1_2d, x12_2d, w3a, w3b, sb3, *, out_dtype):
    m, hp = x1_2d.shape
    cout = w3a.shape[1]
    tm = _choose_tm(m)
    return pl.pallas_call(
        _concat_mm_bn_silu_kernel,
        out_shape=jax.ShapeDtypeStruct((m, cout), out_dtype),
        grid_spec=pltpu.PrefetchScalarGridSpec(
            num_scalar_prefetch=0,
            grid=(m // tm,),
            in_specs=[
                pl.BlockSpec((tm, hp), lambda i: (i, 0)),
                pl.BlockSpec((tm, hp), lambda i: (i, 1)),   # x2 = 2nd channel half of x12
                pl.BlockSpec((hp, cout), lambda i: (0, 0)),
                pl.BlockSpec((hp, cout), lambda i: (0, 0)),
                pl.BlockSpec((2, cout), lambda i: (0, 0)),
            ],
            out_specs=pl.BlockSpec((tm, cout), lambda i: (i, 0)),
        ),
        compiler_params=pltpu.CompilerParams(dimension_semantics=("parallel",)),
    )(x1_2d, x12_2d, w3a, w3b, sb3)


# ---------------------------------- full forward -----------------------------------
def csp_layer_forward(x_nchw, p):
    n, cin, h, w = x_nchw.shape
    assert cin == p["cin"]
    m = n * h * w
    cin_p, hp, cout_p = p["cin_p"], p["hp"], p["cout_p"]

    # NCHW -> NHWC, bf16, channel pad to a lane multiple (one boundary op).
    x = jnp.transpose(x_nchw, (0, 2, 3, 1)).astype(jnp.bfloat16)
    if cin_p != cin:
        x = jnp.pad(x, ((0, 0), (0, 0), (0, 0), (0, cin_p - cin)))

    # Stage 1: conv1 and conv2 fused over a single read of x -> (M, 2*hp)
    x12 = conv1x1_bn_silu(x.reshape(m, cin_p), p["w12"], p["sb12"],
                          out_dtype=jnp.bfloat16)
    x12_img = x12.reshape(n, h, w, 2 * hp)

    # Bottleneck chain (each block fully fused in one kernel).
    cur = x12_img
    first = True
    for blk in p["bottlenecks"]:
        cur = bottleneck_fused(cur, 0 if not first else 0,
                               blk["w1"], blk["sb1"], blk["w2"], blk["sb2"])
        first = False
    if p["bottlenecks"]:
        x1_2d = cur.reshape(m, hp)
    else:
        x1_2d = x12[:, :hp]

    # conv3 with the concat fused via split weights (x2 read straight out of x12).
    out2d = conv3_concat_fused(x1_2d, x12, p["w3a"], p["w3b"], p["sb3"],
                               out_dtype=jnp.float32)
    out = out2d.reshape(n, h, w, cout_p)[..., :p["cout"]]
    return jnp.transpose(out, (0, 3, 1, 2))                 # NHWC -> NCHW


# ----------------------------- deterministic parameters -----------------------------
def make_params(in_channels, out_channels, n, key):
    hidden = int(out_channels * 0.5)
    keys = jax.random.split(key, 4 + 2 * n)

    def bn(c, shift):
        gamma = 1.0 + 0.01 * jnp.arange(c, dtype=jnp.float32)
        beta = shift + 0.02 * jnp.arange(c, dtype=jnp.float32)
        mean = 0.01 * jnp.arange(c, dtype=jnp.float32)
        var = 1.0 + 0.05 * jnp.arange(c, dtype=jnp.float32)
        return (gamma, beta, mean, var)

    raw = {
        "hidden": hidden,
        "w1": 0.1 * jax.random.normal(keys[0], (in_channels, hidden), jnp.float32),
        "bn1": bn(hidden, 0.0),
        "w2": 0.1 * jax.random.normal(keys[1], (in_channels, hidden), jnp.float32),
        "bn2": bn(hidden, 0.05),
        "w3": 0.1 * jax.random.normal(keys[2], (2 * hidden, out_channels), jnp.float32),
        "bn3": bn(out_channels, 0.1),
        "bottlenecks": [],
    }
    for b in range(n):
        raw["bottlenecks"].append({
            "w1": 0.1 * jax.random.normal(keys[3 + 2 * b], (hidden, hidden), jnp.float32),
            "bn1": bn(hidden, 0.02),
            # 3x3 conv weight stored as (kh, kw, cin, cout)
            "w2": 0.1 * jax.random.normal(keys[4 + 2 * b], (3, 3, hidden, hidden),
                                          jnp.float32),
            "bn2": bn(hidden, -0.02),
        })
    return raw


def _fold_bn(bn, eps=1e-5):
    gamma, beta, mean, var = bn
    scale = gamma / jnp.sqrt(var + eps)
    bias = beta - mean * scale
    return scale, bias


def _sb_table(bn, c_pad):
    scale, bias = _fold_bn(bn)
    c = scale.shape[0]
    sb = jnp.zeros((2, c_pad), jnp.float32)
    return sb.at[0, :c].set(scale).at[1, :c].set(bias)


def prepare_kernel_params(raw, cin, cout):
    hidden = raw["hidden"]
    cin_p = _round_up(cin, LANE)
    hp = _round_up(hidden, LANE)
    cout_p = _round_up(cout, LANE)

    # conv1 & conv2 share the input read: concatenate their (padded) weights.
    w12 = jnp.zeros((cin_p, 2 * hp), jnp.float32)
    w12 = w12.at[:cin, :hidden].set(raw["w1"])
    w12 = w12.at[:cin, hp:hp + hidden].set(raw["w2"])
    s1, b1 = _fold_bn(raw["bn1"])
    s2, b2 = _fold_bn(raw["bn2"])
    sb12 = jnp.zeros((2, 2 * hp), jnp.float32)
    sb12 = sb12.at[0, :hidden].set(s1).at[1, :hidden].set(b1)
    sb12 = sb12.at[0, hp:hp + hidden].set(s2).at[1, hp:hp + hidden].set(b2)

    blocks = []
    for blk in raw["bottlenecks"]:
        wb1 = jnp.zeros((hp, hp), jnp.float32).at[:hidden, :hidden].set(blk["w1"])
        wb2 = jnp.zeros((9, hp, hp), jnp.float32).at[:, :hidden, :hidden].set(
            blk["w2"].reshape(9, hidden, hidden))
        blocks.append(dict(
            w1=wb1.astype(jnp.bfloat16), sb1=_sb_table(blk["bn1"], hp),
            w2=wb2.astype(jnp.bfloat16), sb2=_sb_table(blk["bn2"], hp)))

    # conv3 weight split into the two halves of the (virtual) concat.
    w3a = jnp.zeros((hp, cout_p), jnp.float32).at[:hidden, :cout].set(raw["w3"][:hidden])
    w3b = jnp.zeros((hp, cout_p), jnp.float32).at[:hidden, :cout].set(raw["w3"][hidden:])

    return dict(
        cin=cin, cout=cout, hidden=hidden, cin_p=cin_p, hp=hp, cout_p=cout_p,
        w12=w12.astype(jnp.bfloat16), sb12=sb12,
        bottlenecks=blocks,
        w3a=w3a.astype(jnp.bfloat16), w3b=w3b.astype(jnp.bfloat16),
        sb3=_sb_table(raw["bn3"], cout_p),
    )


# --------------------------------- pure-JAX reference --------------------------------
def ref_forward(x_nchw, raw):
    x = x_nchw.astype(jnp.float32)

    def bn_silu(y, bn):
        scale, bias = _fold_bn(bn)
        y = y * scale.reshape(1, -1, 1, 1) + bias.reshape(1, -1, 1, 1)
        return y * jax.nn.sigmoid(y)

    def conv1x1(x, w, bn):
        y = jnp.einsum("nchw,cd->ndhw", x, w, precision=lax.Precision.HIGHEST)
        return bn_silu(y, bn)

    def conv3x3(x, w, bn):
        y = lax.conv_general_dilated(
            x, w, (1, 1), "SAME",
            dimension_numbers=("NCHW", "HWIO", "NCHW"),
            precision=lax.Precision.HIGHEST)
        return bn_silu(y, bn)

    x1 = conv1x1(x, raw["w1"], raw["bn1"])
    x2 = conv1x1(x, raw["w2"], raw["bn2"])
    for blk in raw["bottlenecks"]:
        y = conv1x1(x1, blk["w1"], blk["bn1"])
        y = conv3x3(y, blk["w2"], blk["bn2"])
        x1 = y + x1                                  # shortcut (in == out channels)
    cat = jnp.concatenate([x1, x2], axis=1)
    return conv1x1(cat, raw["w3"], raw["bn3"])


if __name__ == "__main__":
    key = jax.random.PRNGKey(0)
    kx, kp = jax.random.split(key)

    N, Cin, H, W = 2, 4, 16, 16
    Cout, n_blocks = 4, 1
    x = jax.random.normal(kx, (N, Cin, H, W), jnp.float32)   # NCHW as in PyTorch

    raw = make_params(Cin, Cout, n_blocks, kp)
    kparams = prepare_kernel_params(raw, Cin, Cout)

    out = jax.block_until_ready(csp_layer_forward(x, kparams))
    ref = jax.block_until_ready(ref_forward(x, raw))

    assert out.shape == (N, Cout, H, W), out.shape
    max_err = float(jnp.max(jnp.abs(out - ref)))
    # bf16 MXU inputs + approx reciprocal SiLU -> slightly looser tolerance vs f32 ref.
    assert jnp.allclose(out, ref, atol=1e-2, rtol=1e-2), max_err
    print("KERNEL_OK")
</pallas_src>

<mosaic_0001>
module attributes {stable_mosaic.version = 11 : i64} {
  func.func @_mm_bn_silu_kernel(%arg0: i32, %arg1: memref<512x128xbf16, #tpu.memory_space<vmem>>, %arg2: memref<128x256xbf16, #tpu.memory_space<vmem>>, %arg3: memref<2x256xf32, #tpu.memory_space<vmem>>, %arg4: memref<512x256xbf16, #tpu.memory_space<vmem>>) attributes {dimension_semantics = [#tpu.dimension_semantics<parallel>], iteration_bounds = array<i64: 1>, scalar_prefetch = 0 : i64, scratch_operands = 0 : i64, tpu.core_type = #tpu.core_type<tc>, window_params = [{transform_indices = @transform_0, window_bounds = array<i64: 512, 128>}, {pipeline_mode = #tpu.pipeline_mode<synchronous>, transform_indices = @transform_1, window_bounds = array<i64: 128, 256>}, {pipeline_mode = #tpu.pipeline_mode<synchronous>, transform_indices = @transform_2, window_bounds = array<i64: 2, 256>}, {transform_indices = @transform_3, window_bounds = array<i64: 512, 256>}]} {
    %c0 = arith.constant 0 : index
    %c0_0 = arith.constant 0 : index
    %0 = vector.load %arg1[%c0, %c0_0] : memref<512x128xbf16, #tpu.memory_space<vmem>>, vector<512x128xbf16>
    %c0_1 = arith.constant 0 : index
    %c0_2 = arith.constant 0 : index
    %1 = vector.load %arg2[%c0_1, %c0_2] : memref<128x256xbf16, #tpu.memory_space<vmem>>, vector<128x256xbf16>
    %cst = arith.constant dense<0.000000e+00> : vector<512x256xf32>
    %2 = tpu.matmul %0, %1, %cst {dimension_numbers = #tpu.dot_dimension_numbers<[1], [0], [0], [1], [0, 0, 1, 1], [], []>} : vector<512x128xbf16>, vector<128x256xbf16>, vector<512x256xf32> -> vector<512x256xf32>
    %c0_3 = arith.constant 0 : index
    %c0_4 = arith.constant 0 : index
    %3 = vector.load %arg3[%c0_3, %c0_4] : memref<2x256xf32, #tpu.memory_space<vmem>>, vector<1x256xf32>
    %4 = vector.broadcast %3 : vector<1x256xf32> to vector<512x256xf32>
    %5 = arith.mulf %2, %4 : vector<512x256xf32>
    %c1 = arith.constant 1 : index
    %c0_5 = arith.constant 0 : index
    %6 = vector.load %arg3[%c1, %c0_5] : memref<2x256xf32, #tpu.memory_space<vmem>>, vector<1x256xf32>
    %7 = vector.broadcast %6 : vector<1x256xf32> to vector<512x256xf32>
    %8 = arith.addf %5, %7 : vector<512x256xf32>
    %cst_6 = arith.constant 0.000000e+00 : f32
    %9 = vector.broadcast %cst_6 : f32 to vector<512x256xf32>
    %10 = arith.subf %9, %8 : vector<512x256xf32>
    %11 = math.exp %10 : vector<512x256xf32>
    %cst_7 = arith.constant 1.000000e+00 : f32
    %12 = vector.broadcast %cst_7 : f32 to vector<512x256xf32>
    %13 = arith.addf %12, %11 : vector<512x256xf32>
    %14 = tpu.reciprocal %13 {approx = true} : vector<512x256xf32> -> vector<512x256xf32>
    %15 = arith.mulf %8, %14 : vector<512x256xf32>
    %16 = arith.truncf %15 : vector<512x256xf32> to vector<512x256xbf16>
    %c0_8 = arith.constant 0 : index
    %c0_9 = arith.constant 0 : index
    %17 = vector.load %arg4[%c0_8, %c0_9] : memref<512x256xbf16, #tpu.memory_space<vmem>>, vector<512x256xbf16>
    tpu.vector_store %arg4[%c0_8, %c0_9], %16 {strides = array<i32>} : memref<512x256xbf16, #tpu.memory_space<vmem>>, vector<512x256xbf16>,
    return
  }
  func.func @transform_0(%arg0: i32) -> (i32, i32) {
    %c0_i32 = arith.constant 0 : i32
    %c0_i32_0 = arith.constant 0 : i32
    return %arg0, %c0_i32 : i32, i32
  }
  func.func @transform_1(%arg0: i32) -> (i32, i32) {
    %c0_i32 = arith.constant 0 : i32
    %c0_i32_0 = arith.constant 0 : i32
    %c0_i32_1 = arith.constant 0 : i32
    return %c0_i32, %c0_i32_0 : i32, i32
  }
  func.func @transform_2(%arg0: i32) -> (i32, i32) {
    %c0_i32 = arith.constant 0 : i32
    %c0_i32_0 = arith.constant 0 : i32
    %c0_i32_1 = arith.constant 0 : i32
    return %c0_i32, %c0_i32_0 : i32, i32
  }
  func.func @transform_3(%arg0: i32) -> (i32, i32) {
    %c0_i32 = arith.constant 0 : i32
    %c0_i32_0 = arith.constant 0 : i32
    return %arg0, %c0_i32 : i32, i32
  }
}

</mosaic_0001>

<llo_original>
// kernel: tpu_custom_call.1
$region0: #{tpu_custom_call.1}
  #allocation0 [shape = 'u32[]', space=smem, size = 0x4, offset = 0x4, fixed_abs, tag = 'smem constant byte address 0x4 - core index']
  #allocation1 [shape = 'u32[144,128]{1,0:T(1,128)}', space=vmem, size = 0x12000, scoped, tag = 'internal scratch']
  %s0 = inlined_call_operand.hbm [shape: bf16[512,128], index: 0, kind: input, shape index: {}]
  %s1 = inlined_call_operand.hbm [shape: bf16[128,256], index: 1, kind: input, shape index: {}]
  %s2 = inlined_call_operand.hbm [shape: f32[2,256], index: 2, kind: input, shape index: {}]
  %s3 = inlined_call_operand.hbm [shape: bf16[512,256], index: 3, kind: output, shape index: {}]
  %s4 = sld [smem:[#allocation0]]
  $region34: #{tpu_custom_call.1} parent=0
    _
  %s6 = ssub.s32 1, %s4
  %s7 = scalar_select 0, %s6, %s4
  $region1: #{tpu_custom_call.1} parent=0
    #allocation2 [shape = 'u8[131072]{0}', space=vmem, size = 0x20000, scoped, tag = 'input window, operand 0, single buffered']
    #allocation3 [shape = 's32[1]{0}', space=sflag, size = 0x4, scoped, tag = 'scoped memory for tpu_custom_call.1']
    #allocation4 [shape = 's32[1]{0}', space=sflag, size = 0x4, scoped, tag = 'scoped memory for tpu_custom_call.1']
    #allocation5 [shape = 'u8[65536]{0}', space=vmem, size = 0x10000, scoped, tag = 'input window, operand 1, single buffered']
    #allocation6 [shape = 's32[1]{0}', space=sflag, size = 0x4, scoped, tag = 'scoped memory for tpu_custom_call.1']
    #allocation7 [shape = 'u8[2048]{0}', space=vmem, size = 0x800, scoped, tag = 'input window, operand 2, single buffered']
    #allocation8 [shape = 'u8[262144]{0}', space=vmem, size = 0x40000, scoped, tag = 'output window, operand 0, single buffered']
    %8 = vsyncpa [#allocation3], 0
    %9 = vsyncpa [#allocation6], 0
    %10 = vsyncpa [#allocation4], 0
    // Predicated region
    $region2: #{tpu_custom_call.1} parent=1 // pred_check
      _
    $region3: #{tpu_custom_call.1} parent=1 // pred_check_branch
      %12 = sbr.rel (0) target = $region5
    $region4: #{tpu_custom_call.1} parent=1 // pred_region
      %s14 = ssub.s32 4096, 4096
      %15 = vsyncadd [#allocation3], %s14
      %s16 = sshll.u32 [#allocation2], 4
      %s17 = int_to_ptr.vmem [resolvable:$true] %s16
      %22 = dma.hbm_to_vmem [thread:$0]  %s0, 4096, %s17, [#allocation3], 64, 64, 4
    $region5: #{tpu_custom_call.1} parent=1 // pred_fallthru
      _
    // Predicated region
    $region6: #{tpu_custom_call.1} parent=1 // pred_check
      _
    $region7: #{tpu_custom_call.1} parent=1 // pred_check_branch
      %24 = sbr.rel (0) target = $region9
    $region8: #{tpu_custom_call.1} parent=1 // pred_region
      %s26 = ssub.s32 2048, 2048
      %27 = vsyncadd [#allocation6], %s26
      %s28 = sshll.u32 [#allocation5], 4
      %s29 = int_to_ptr.vmem [resolvable:$true] %s28
      %34 = dma.hbm_to_vmem [thread:$0]  %s1, 2048, %s29, [#allocation6], 128, 128, 8
    $region9: #{tpu_custom_call.1} parent=1 // pred_fallthru
      _
    // Predicated region
    $region10: #{tpu_custom_call.1} parent=1 // pred_check
      _
    $region11: #{tpu_custom_call.1} parent=1 // pred_check_branch
      %36 = sbr.rel (0) target = $region13
    $region12: #{tpu_custom_call.1} parent=1 // pred_region
      %s38 = ssub.s32 64, 64
      %39 = vsyncadd [#allocation6], %s38
      %s41 = sshll.u32 [#allocation7], 4
      %s42 = int_to_ptr.vmem [resolvable:$true] %s41
      %44 = dma.hbm_to_vmem [thread:$0]  %s2, 64, %s42, [#allocation6]
    $region13: #{tpu_custom_call.1} parent=1 // pred_fallthru
      _
    // Predicated region
    $region14: #{tpu_custom_call.1} parent=1 // pred_check
      _
    $region15: #{tpu_custom_call.1} parent=1 // pred_check_branch
      %46 = sbr.rel (0) target = $region17
    $region16: #{tpu_custom_call.1} parent=1 // pred_region
      %47 = dma.done [#allocation3], 4096
    $region17: #{tpu_custom_call.1} parent=1 // pred_fallthru
      _
    // Predicated region
    $region18: #{tpu_custom_call.1} parent=1 // pred_check
      _
    $region19: #{tpu_custom_call.1} parent=1 // pred_check_branch
      %49 = sbr.rel (0) target = $region21
    $region20: #{tpu_custom_call.1} parent=1 // pred_region
      %50 = dma.done [#allocation6], 2048
    $region21: #{tpu_custom_call.1} parent=1 // pred_fallthru
      _
    // Predicated region
    $region22: #{tpu_custom_call.1} parent=1 // pred_check
      _
    $region23: #{tpu_custom_call.1} parent=1 // pred_check_branch
      %52 = sbr.rel (0) target = $region25
    $region24: #{tpu_custom_call.1} parent=1 // pred_region
      %53 = dma.done [#allocation6], 64
    $region25: #{tpu_custom_call.1} parent=1 // pred_fallthru
      _
    %v55 = vld [vmem:[#allocation2] sm:$0xf]
    %v56 = vld [vmem:[#allocation2 + $0x4] sm:$0xf]
    %v57 = vld [vmem:[#allocation2 + $0x8] sm:$0xf]
    %v58 = vld [vmem:[#allocation2 + $0xc] sm:$0xf]
    %v59 = vld [vmem:[#allocation2 + $0x10] sm:$0xf]
    %v60 = vld [vmem:[#allocation2 + $0x14] sm:$0xf]
    %v61 = vld [vmem:[#allocation2 + $0x18] sm:$0xf]
    %v62 = vld [vmem:[#allocation2 + $0x1c] sm:$0xf]
    %v63 = vld [vmem:[#allocation2 + $0x20] sm:$0xf]
    %v64 = vld [vmem:[#allocation2 + $0x24] sm:$0xf]
    %v65 = vld [vmem:[#allocation2 + $0x28] sm:$0xf]
    %v66 = vld [vmem:[#allocation2 + $0x2c] sm:$0xf]
    %v67 = vld [vmem:[#allocation2 + $0x30] sm:$0xf]
    %v68 = vld [vmem:[#allocation2 + $0x34] sm:$0xf]
    %v69 = vld [vmem:[#allocation2 + $0x38] sm:$0xf]
    %v70 = vld [vmem:[#allocation2 + $0x3c] sm:$0xf]
    %v71 = vld [vmem:[#allocation2 + $0x40] sm:$0xf]
    %v72 = vld [vmem:[#allocation2 + $0x44] sm:$0xf]
    %v73 = vld [vmem:[#allocation2 + $0x48] sm:$0xf]
    %v74 = vld [vmem:[#allocation2 + $0x4c] sm:$0xf]
    %v75 = vld [vmem:[#allocation2 + $0x50] sm:$0xf]
    %v76 = vld [vmem:[#allocation2 + $0x54] sm:$0xf]
    %v77 = vld [vmem:[#allocation2 + $0x58] sm:$0xf]
    %v78 = vld [vmem:[#allocation2 + $0x5c] sm:$0xf]
    %v79 = vld [vmem:[#allocation2 + $0x60] sm:$0xf]
    %v80 = vld [vmem:[#allocation2 + $0x64] sm:$0xf]
    %v81 = vld [vmem:[#allocation2 + $0x68] sm:$0xf]
    %v82 = vld [vmem:[#allocation2 + $0x6c] sm:$0xf]
    %v83 = vld [vmem:[#allocation2 + $0x70] sm:$0xf]
    %v84 = vld [vmem:[#allocation2 + $0x74] sm:$0xf]
    %v85 = vld [vmem:[#allocation2 + $0x78] sm:$0xf]
    %v86 = vld [vmem:[#allocation2 + $0x7c] sm:$0xf]
    %v87 = vld [vmem:[#allocation2 + $0x80] sm:$0xf]
    %v88 = vld [vmem:[#allocation2 + $0x84] sm:$0xf]
    %v89 = vld [vmem:[#allocation2 + $0x88] sm:$0xf]
    %v90 = vld [vmem:[#allocation2 + $0x8c] sm:$0xf]
    %v91 = vld [vmem:[#allocation2 + $0x90] sm:$0xf]
    %v92 = vld [vmem:[#allocation2 + $0x94] sm:$0xf]
    %v93 = vld [vmem:[#allocation2 + $0x98] sm:$0xf]
    %v94 = vld [vmem:[#allocation2 + $0x9c] sm:$0xf]
    %v95 = vld [vmem:[#allocation2 + $0xa0] sm:$0xf]
    %v96 = vld [vmem:[#allocation2 + $0xa4] sm:$0xf]
    %v97 = vld [vmem:[#allocation2 + $0xa8] sm:$0xf]
    %v98 = vld [vmem:[#allocation2 + $0xac] sm:$0xf]
    %v99 = vld [vmem:[#allocation2 + $0xb0] sm:$0xf]
    %v100 = vld [vmem:[#allocation2 + $0xb4] sm:$0xf]
    %v101 = vld [vmem:[#allocation2 + $0xb8] sm:$0xf]
    %v102 = vld [vmem:[#allocation2 + $0xbc] sm:$0xf]
    %v103 = vld [vmem:[#allocation2 + $0xc0] sm:$0xf]
    %v104 = vld [vmem:[#allocation2 + $0xc4] sm:$0xf]
    %v105 = vld [vmem:[#allocation2 + $0xc8] sm:$0xf]
    %v106 = vld [vmem:[#allocation2 + $0xcc] sm:$0xf]
    %v107 = vld [vmem:[#allocation2 + $0xd0] sm:$0xf]
    %v108 = vld [vmem:[#allocation2 + $0xd4] sm:$0xf]
    %v109 = vld [vmem:[#allocation2 + $0xd8] sm:$0xf]
    %v110 = vld [vmem:[#allocation2 + $0xdc] sm:$0xf]
    %v111 = vld [vmem:[#allocation2 + $0xe0] sm:$0xf]
    %v112 = vld [vmem:[#allocation2 + $0xe4] sm:$0xf]
    %v113 = vld [vmem:[#allocation2 + $0xe8] sm:$0xf]
    %v114 = vld [vmem:[#allocation2 + $0xec] sm:$0xf]
    %v115 = vld [vmem:[#allocation2 + $0xf0] sm:$0xf]
    %v116 = vld [vmem:[#allocation2 + $0xf4] sm:$0xf]
    %v117 = vld [vmem:[#allocation2 + $0xf8] sm:$0xf]
    %v118 = vld [vmem:[#allocation2 + $0xfc] sm:$0xf]
    %v119 = vld [vmem:[#allocation5] sm:$0xff]
    %v120 = vld [vmem:[#allocation5 + $0x8] sm:$0xff]
    %v121 = vld [vmem:[#allocation5 + $0x10] sm:$0xff]
    %v122 = vld [vmem:[#allocation5 + $0x18] sm:$0xff]
    %v123 = vld [vmem:[#allocation5 + $0x20] sm:$0xff]
    %v124 = vld [vmem:[#allocation5 + $0x28] sm:$0xff]
    %v125 = vld [vmem:[#allocation5 + $0x30] sm:$0xff]
    %v126 = vld [vmem:[#allocation5 + $0x38] sm:$0xff]
    %v127 = vld [vmem:[#allocation5 + $0x40] sm:$0xff]
    %v128 = vld [vmem:[#allocation5 + $0x48] sm:$0xff]
    %v129 = vld [vmem:[#allocation5 + $0x50] sm:$0xff]
    %v130 = vld [vmem:[#allocation5 + $0x58] sm:$0xff]
    %v131 = vld [vmem:[#allocation5 + $0x60] sm:$0xff]
    %v132 = vld [vmem:[#allocation5 + $0x68] sm:$0xff]
    %v133 = vld [vmem:[#allocation5 + $0x70] sm:$0xff]
    %v134 = vld [vmem:[#allocation5 + $0x78] sm:$0xff]
    %v199 = vunpack.c.l.b16 %v55
    %v200 = vunpack.c.l.b16 %v56
    %v201 = vunpack.c.l.b16 %v57
    %v202 = vunpack.c.l.b16 %v58
    %v203 = vunpack.c.l.b16 %v59
    %v204 = vunpack.c.l.b16 %v60
    %v205 = vunpack.c.l.b16 %v61
    %v206 = vunpack.c.l.b16 %v62
    %v207 = vunpack.c.l.b16 %v63
    %v208 = vunpack.c.l.b16 %v64
    %v209 = vunpack.c.l.b16 %v65
    %v210 = vunpack.c.l.b16 %v66
    %v211 = vunpack.c.l.b16 %v67
    %v212 = vunpack.c.l.b16 %v68
    %v213 = vunpack.c.l.b16 %v69
    %v214 = vunpack.c.l.b16 %v70
    %v215 = vunpack.c.l.b16 %v71
    %v216 = vunpack.c.l.b16 %v72
    %v217 = vunpack.c.l.b16 %v73
    %v218 = vunpack.c.l.b16 %v74
    %v219 = vunpack.c.l.b16 %v75
    %v220 = vunpack.c.l.b16 %v76
    %v221 = vunpack.c.l.b16 %v77
    %v222 = vunpack.c.l.b16 %v78
    %v223 = vunpack.c.l.b16 %v79
    %v224 = vunpack.c.l.b16 %v80
    %v225 = vunpack.c.l.b16 %v81
    %v226 = vunpack.c.l.b16 %v82
    %v227 = vunpack.c.l.b16 %v83
    %v228 = vunpack.c.l.b16 %v84
    %v229 = vunpack.c.l.b16 %v85
    %v230 = vunpack.c.l.b16 %v86
    %v231 = vunpack.c.l.b16 %v87
    %v232 = vunpack.c.l.b16 %v88
    %v233 = vunpack.c.l.b16 %v89
    %v234 = vunpack.c.l.b16 %v90
    %v235 = vunpack.c.l.b16 %v91
    %v236 = vunpack.c.l.b16 %v92
    %v237 = vunpack.c.l.b16 %v93
    %v238 = vunpack.c.l.b16 %v94
    %v239 = vunpack.c.l.b16 %v95
    %v240 = vunpack.c.l.b16 %v96
    %v241 = vunpack.c.l.b16 %v97
    %v242 = vunpack.c.l.b16 %v98
    %v243 = vunpack.c.l.b16 %v99
    %v244 = vunpack.c.l.b16 %v100
    %v245 = vunpack.c.l.b16 %v101
    %v246 = vunpack.c.l.b16 %v102
    %v247 = vunpack.c.l.b16 %v103
    %v248 = vunpack.c.l.b16 %v104
    %v249 = vunpack.c.l.b16 %v105
    %v250 = vunpack.c.l.b16 %v106
    %v251 = vunpack.c.l.b16 %v107
    %v252 = vunpack.c.l.b16 %v108
    %v253 = vunpack.c.l.b16 %v109
    %v254 = vunpack.c.l.b16 %v110
    %v255 = vunpack.c.l.b16 %v111
    %v256 = vunpack.c.l.b16 %v112
    %v257 = vunpack.c.l.b16 %v113
    %v258 = vunpack.c.l.b16 %v114
    %v259 = vunpack.c.l.b16 %v115
    %v260 = vunpack.c.l.b16 %v116
    %v261 = vunpack.c.l.b16 %v117
    %v262 = vunpack.c.l.b16 %v118
    %v263 = vpack.c.b16 %v200, %v199
    %v264 = vpack.c.b16 %v202, %v201
    %v265 = vpack.c.b16 %v204, %v203
    %v266 = vpack.c.b16 %v206, %v205
    %v267 = vpack.c.b16 %v208, %v207
    %v268 = vpack.c.b16 %v210, %v209
    %v269 = vpack.c.b16 %v212, %v211
    %v270 = vpack.c.b16 %v214, %v213
    %v271 = vpack.c.b16 %v216, %v215
    %v272 = vpack.c.b16 %v218, %v217
    %v273 = vpack.c.b16 %v220, %v219
    %v274 = vpack.c.b16 %v222, %v221
    %v275 = vpack.c.b16 %v224, %v223
    %v276 = vpack.c.b16 %v226, %v225
    %v277 = vpack.c.b16 %v228, %v227
    %v278 = vpack.c.b16 %v230, %v229
    %v279 = vpack.c.b16 %v232, %v231
    %v280 = vpack.c.b16 %v234, %v233
    %v281 = vpack.c.b16 %v236, %v235
    %v282 = vpack.c.b16 %v238, %v237
    %v283 = vpack.c.b16 %v240, %v239
    %v284 = vpack.c.b16 %v242, %v241
    %v285 = vpack.c.b16 %v244, %v243
    %v286 = vpack.c.b16 %v246, %v245
    %v287 = vpack.c.b16 %v248, %v247
    %v288 = vpack.c.b16 %v250, %v249
    %v289 = vpack.c.b16 %v252, %v251
    %v290 = vpack.c.b16 %v254, %v253
    %v291 = vpack.c.b16 %v256, %v255
    %v292 = vpack.c.b16 %v258, %v257
    %v293 = vpack.c.b16 %v260, %v259
    %v294 = vpack.c.b16 %v262, %v261
    %v343 = vunpack.c.l.b16 %v119
    %v344 = vunpack.c.h.b16 %v119
    %v345 = vunpack.c.l.b16 %v120
    %v346 = vunpack.c.h.b16 %v120
    %v347 = vunpack.c.l.b16 %v121
    %v348 = vunpack.c.h.b16 %v121
    %v349 = vunpack.c.l.b16 %v122
    %v350 = vunpack.c.h.b16 %v122
    %v351 = vunpack.c.l.b16 %v123
    %v352 = vunpack.c.h.b16 %v123
    %v353 = vunpack.c.l.b16 %v124
    %v354 = vunpack.c.h.b16 %v124
    %v355 = vunpack.c.l.b16 %v125
    %v356 = vunpack.c.h.b16 %v125
    %v357 = vunpack.c.l.b16 %v126
    %v358 = vunpack.c.h.b16 %v126
    %v359 = vunpack.c.l.b16 %v127
    %v360 = vunpack.c.h.b16 %v127
    %v361 = vunpack.c.l.b16 %v128
    %v362 = vunpack.c.h.b16 %v128
    %v363 = vunpack.c.l.b16 %v129
    %v364 = vunpack.c.h.b16 %v129
    %v365 = vunpack.c.l.b16 %v130
    %v366 = vunpack.c.h.b16 %v130
    %v367 = vunpack.c.l.b16 %v131
    %v368 = vunpack.c.h.b16 %v131
    %v369 = vunpack.c.l.b16 %v132
    %v370 = vunpack.c.h.b16 %v132
    %v371 = vunpack.c.l.b16 %v133
    %v372 = vunpack.c.h.b16 %v133
    %v373 = vunpack.c.l.b16 %v134
    %v374 = vunpack.c.h.b16 %v134
    %v375 = vpack.c.b16 %v345, %v343
    %v376 = vpack.c.b16 %v346, %v344
    %v377 = vpack.c.b16 %v349, %v347
    %v378 = vpack.c.b16 %v350, %v348
    %v379 = vpack.c.b16 %v353, %v351
    %v380 = vpack.c.b16 %v354, %v352
    %v381 = vpack.c.b16 %v357, %v355
    %v382 = vpack.c.b16 %v358, %v356
    %v383 = vpack.c.b16 %v361, %v359
    %v384 = vpack.c.b16 %v362, %v360
    %v385 = vpack.c.b16 %v365, %v363
    %v386 = vpack.c.b16 %v366, %v364
    %v387 = vpack.c.b16 %v369, %v367
    %v388 = vpack.c.b16 %v370, %v368
    %v389 = vpack.c.b16 %v373, %v371
    %v390 = vpack.c.b16 %v374, %v372
    %407 = vmatprep.subr.bf16.mxu0 %v390
    %408 = vmatpush1.bf16.msra.mxu0 %v389
    %409 = vmatprep.subr.bf16.mxu0 %v388
    %410 = vmatpush1.bf16.msra.mxu0 %v387
    %411 = vmatprep.subr.bf16.mxu0 %v386
    %412 = vmatpush1.bf16.msra.mxu0 %v385
    %413 = vmatprep.subr.bf16.mxu0 %v384
    %414 = vmatpush1.bf16.msra.mxu0 %v383
    %415 = vmatprep.subr.bf16.mxu0 %v382
    %416 = vmatpush1.bf16.msra.mxu0 %v381
    %417 = vmatprep.subr.bf16.mxu0 %v380
    %418 = vmatpush1.bf16.msra.mxu0 %v379
    %419 = vmatprep.subr.bf16.mxu0 %v378
    %420 = vmatpush1.bf16.msra.mxu0 %v377
    %421 = vmatprep.subr.bf16.mxu0 %v376
    %422 = vmatpush1.bf16.msra.mxu0 %v375
    %423 = vmatprep.subr.bf16.mxu0 0
    %424 = vmatpush2.bf16.msra.mxu0 0
    %425 = vmatprep.subr.bf16.mxu0 0
    %426 = vmatpush2.bf16.msra.mxu0 0
    %427 = vmatprep.subr.bf16.mxu0 0
    %428 = vmatpush2.bf16.msra.mxu0 0
    %429 = vmatprep.subr.bf16.mxu0 0
    %430 = vmatpush2.bf16.msra.mxu0 0
    %431 = vmatprep.subr.bf16.mxu0 0
    %432 = vmatpush2.bf16.msra.mxu0 0
    %433 = vmatprep.subr.bf16.mxu0 0
    %434 = vmatpush2.bf16.msra.mxu0 0
    %435 = vmatprep.subr.bf16.mxu0 0
    %436 = vmatpush2.bf16.msra.mxu0 0
    %437 = vmatprep.subr.bf16.mxu0 0
    %438 = vmatpush2.bf16.msra.mxu0 0
    %439 = vmatprep.mubr.bf16.mxu0 0
    %440 = vmatmul.mubr.bf16.gmra.mxu0 %v263
    %v441 = vpop.f32.mrf.mxu0
    %v442 = vadd.f32 0.0, %v441
    %v443 = vpop.f32.mrf.mxu0
    %v444 = vadd.f32 0.0, %v443
    %v445 = vpop.f32.mrf.mxu0
    %v446 = vadd.f32 0.0, %v445
    %v447 = vpop.f32.mrf.mxu0
    %v448 = vadd.f32 0.0, %v447
    %449 = vmatprep.mubr.bf16.mxu0 0
    %450 = vmatmul.mubr.bf16.gmra.mxu0 %v264
    %v451 = vpop.f32.mrf.mxu0
    %v452 = vadd.f32 0.0, %v451
    %v453 = vpop.f32.mrf.mxu0
    %v454 = vadd.f32 0.0, %v453
    %v455 = vpop.f32.mrf.mxu0
    %v456 = vadd.f32 0.0, %v455
    %v457 = vpop.f32.mrf.mxu0
    %v458 = vadd.f32 0.0, %v457
    %459 = vmatprep.mubr.bf16.mxu0 0
    %460 = vmatmul.mubr.bf16.gmra.mxu0 %v265
    %v461 = vpop.f32.mrf.mxu0
    %v462 = vadd.f32 0.0, %v461
    %v463 = vpop.f32.mrf.mxu0
    %v464 = vadd.f32 0.0, %v463
    %v465 = vpop.f32.mrf.mxu0
    %v466 = vadd.f32 0.0, %v465
    %v467 = vpop.f32.mrf.mxu0
    %v468 = vadd.f32 0.0, %v467
    %469 = vmatprep.mubr.bf16.mxu0 0
    %470 = vmatmul.mubr.bf16.gmra.mxu0 %v266
    %v471 = vpop.f32.mrf.mxu0
    %v472 = vadd.f32 0.0, %v471
    %v473 = vpop.f32.mrf.mxu0
    %v474 = vadd.f32 0.0, %v473
    %v475 = vpop.f32.mrf.mxu0
    %v476 = vadd.f32 0.0, %v475
    %v477 = vpop.f32.mrf.mxu0
    %v478 = vadd.f32 0.0, %v477
    %479 = vmatprep.mubr.bf16.mxu0 0
    %480 = vmatmul.mubr.bf16.gmra.mxu0 %v267
    %v481 = vpop.f32.mrf.mxu0
    %v482 = vadd.f32 0.0, %v481
    %v483 = vpop.f32.mrf.mxu0
    %v484 = vadd.f32 0.0, %v483
    %v485 = vpop.f32.mrf.mxu0
    %v486 = vadd.f32 0.0, %v485
    %v487 = vpop.f32.mrf.mxu0
    %v488 = vadd.f32 0.0, %v487
    %489 = vmatprep.mubr.bf16.mxu0 0
    %490 = vmatmul.mubr.bf16.gmra.mxu0 %v268
    %v491 = vpop.f32.mrf.mxu0
    %v492 = vadd.f32 0.0, %v491
    %v493 = vpop.f32.mrf.mxu0
    %v494 = vadd.f32 0.0, %v493
    %v495 = vpop.f32.mrf.mxu0
    %v496 = vadd.f32 0.0, %v495
    %v497 = vpop.f32.mrf.mxu0
    %v498 = vadd.f32 0.0, %v497
    %499 = vmatprep.mubr.bf16.mxu0 0
    %500 = vmatmul.mubr.bf16.gmra.mxu0 %v269
    %v501 = vpop.f32.mrf.mxu0
    %v502 = vadd.f32 0.0, %v501
    %v503 = vpop.f32.mrf.mxu0
    %v504 = vadd.f32 0.0, %v503
    %v505 = vpop.f32.mrf.mxu0
    %v506 = vadd.f32 0.0, %v505
    %v507 = vpop.f32.mrf.mxu0
    %v508 = vadd.f32 0.0, %v507
    %509 = vmatprep.mubr.bf16.mxu0 0
    %510 = vmatmul.mubr.bf16.gmra.mxu0 %v270
    %v511 = vpop.f32.mrf.mxu0
    %v512 = vadd.f32 0.0, %v511
    %v513 = vpop.f32.mrf.mxu0
    %v514 = vadd.f32 0.0, %v513
    %v515 = vpop.f32.mrf.mxu0
    %v516 = vadd.f32 0.0, %v515
    %v517 = vpop.f32.mrf.mxu0
    %v518 = vadd.f32 0.0, %v517
    %519 = vmatprep.mubr.bf16.mxu0 0
    %520 = vmatmul.mubr.bf16.gmra.mxu0 %v271
    %v521 = vpop.f32.mrf.mxu0
    %v522 = vadd.f32 0.0, %v521
    %v523 = vpop.f32.mrf.mxu0
    %v524 = vadd.f32 0.0, %v523
    %v525 = vpop.f32.mrf.mxu0
    %v526 = vadd.f32 0.0, %v525
    %v527 = vpop.f32.mrf.mxu0
    %v528 = vadd.f32 0.0, %v527
    %529 = vmatprep.mubr.bf16.mxu0 0
    %530 = vmatmul.mubr.bf16.gmra.mxu0 %v272
    %v531 = vpop.f32.mrf.mxu0
    %v532 = vadd.f32 0.0, %v531
    %v533 = vpop.f32.mrf.mxu0
    %v534 = vadd.f32 0.0, %v533
    %v535 = vpop.f32.mrf.mxu0
    %v536 = vadd.f32 0.0, %v535
    %v537 = vpop.f32.mrf.mxu0
    %v538 = vadd.f32 0.0, %v537
    %539 = vmatprep.mubr.bf16.mxu0 0
    %540 = vmatmul.mubr.bf16.gmra.mxu0 %v273
    %v541 = vpop.f32.mrf.mxu0
    %v542 = vadd.f32 0.0, %v541
    %v543 = vpop.f32.mrf.mxu0
    %v544 = vadd.f32 0.0, %v543
    %v545 = vpop.f32.mrf.mxu0
    %v546 = vadd.f32 0.0, %v545
    %v547 = vpop.f32.mrf.mxu0
    %v548 = vadd.f32 0.0, %v547
    %549 = vmatprep.mubr.bf16.mxu0 0
    %550 = vmatmul.mubr.bf16.gmra.mxu0 %v274
    %v551 = vpop.f32.mrf.mxu0
    %v552 = vadd.f32 0.0, %v551
    %v553 = vpop.f32.mrf.mxu0
    %v554 = vadd.f32 0.0, %v553
    %v555 = vpop.f32.mrf.mxu0
    %v556 = vadd.f32 0.0, %v555
    %v557 = vpop.f32.mrf.mxu0
    %v558 = vadd.f32 0.0, %v557
    %559 = vmatprep.mubr.bf16.mxu0 0
    %560 = vmatmul.mubr.bf16.gmra.mxu0 %v275
    %v561 = vpop.f32.mrf.mxu0
    %v562 = vadd.f32 0.0, %v561
    %v563 = vpop.f32.mrf.mxu0
    %v564 = vadd.f32 0.0, %v563
    %v565 = vpop.f32.mrf.mxu0
    %v566 = vadd.f32 0.0, %v565
    %v567 = vpop.f32.mrf.mxu0
    %v568 = vadd.f32 0.0, %v567
    %569 = vmatprep.mubr.bf16.mxu0 0
    %570 = vmatmul.mubr.bf16.gmra.mxu0 %v276
    %v571 = vpop.f32.mrf.mxu0
    %v572 = vadd.f32 0.0, %v571
    %v573 = vpop.f32.mrf.mxu0
    %v574 = vadd.f32 0.0, %v573
    %v575 = vpop.f32.mrf.mxu0
    %v576 = vadd.f32 0.0, %v575
    %v577 = vpop.f32.mrf.mxu0
    %v578 = vadd.f32 0.0, %v577
    %579 = vmatprep.mubr.bf16.mxu0 0
    %580 = vmatmul.mubr.bf16.gmra.mxu0 %v277
    %v581 = vpop.f32.mrf.mxu0
    %v582 = vadd.f32 0.0, %v581
    %v583 = vpop.f32.mrf.mxu0
    %v584 = vadd.f32 0.0, %v583
    %v585 = vpop.f32.mrf.mxu0
    %v586 = vadd.f32 0.0, %v585
    %v587 = vpop.f32.mrf.mxu0
    %v588 = vadd.f32 0.0, %v587
    %589 = vmatprep.mubr.bf16.mxu0 0
    %590 = vmatmul.mubr.bf16.gmra.mxu0 %v278
    %v591 = vpop.f32.mrf.mxu0
    %v592 = vadd.f32 0.0, %v591
    %v593 = vpop.f32.mrf.mxu0
    %v594 = vadd.f32 0.0, %v593
    %v595 = vpop.f32.mrf.mxu0
    %v596 = vadd.f32 0.0, %v595
    %v597 = vpop.f32.mrf.mxu0
    %v598 = vadd.f32 0.0, %v597
    %599 = vmatprep.mubr.bf16.mxu0 0
    %600 = vmatmul.mubr.bf16.gmra.mxu0 %v279
    %v601 = vpop.f32.mrf.mxu0
    %v602 = vadd.f32 0.0, %v601
    %v603 = vpop.f32.mrf.mxu0
    %v604 = vadd.f32 0.0, %v603
    %v605 = vpop.f32.mrf.mxu0
    %v606 = vadd.f32 0.0, %v605
    %v607 = vpop.f32.mrf.mxu0
    %v608 = vadd.f32 0.0, %v607
    %609 = vmatprep.mubr.bf16.mxu0 0
    %610 = vmatmul.mubr.bf16.gmra.mxu0 %v280
    %v611 = vpop.f32.mrf.mxu0
    %v612 = vadd.f32 0.0, %v611
    %v613 = vpop.f32.mrf.mxu0
    %v614 = vadd.f32 0.0, %v613
    %v615 = vpop.f32.mrf.mxu0
    %v616 = vadd.f32 0.0, %v615
    %v617 = vpop.f32.mrf.mxu0
    %v618 = vadd.f32 0.0, %v617
    %619 = vmatprep.mubr.bf16.mxu0 0
    %620 = vmatmul.mubr.bf16.gmra.mxu0 %v281
    %v621 = vpop.f32.mrf.mxu0
    %v622 = vadd.f32 0.0, %v621
    %v623 = vpop.f32.mrf.mxu0
    %v624 = vadd.f32 0.0, %v623
    %v625 = vpop.f32.mrf.mxu0
    %v626 = vadd.f32 0.0, %v625
    %v627 = vpop.f32.mrf.mxu0
    %v628 = vadd.f32 0.0, %v627
    %629 = vmatprep.mubr.bf16.mxu0 0
    %630 = vmatmul.mubr.bf16.gmra.mxu0 %v282
    %v631 = vpop.f32.mrf.mxu0
    %v632 = vadd.f32 0.0, %v631
    %v633 = vpop.f32.mrf.mxu0
    %v634 = vadd.f32 0.0, %v633
    %v635 = vpop.f32.mrf.mxu0
    %v636 = vadd.f32 0.0, %v635
    %v637 = vpop.f32.mrf.mxu0
    %v638 = vadd.f32 0.0, %v637
    %639 = vmatprep.mubr.bf16.mxu0 0
    %640 = vmatmul.mubr.bf16.gmra.mxu0 %v283
    %v641 = vpop.f32.mrf.mxu0
    %v642 = vadd.f32 0.0, %v641
    %v643 = vpop.f32.mrf.mxu0
    %v644 = vadd.f32 0.0, %v643
    %v645 = vpop.f32.mrf.mxu0
    %v646 = vadd.f32 0.0, %v645
    %v647 = vpop.f32.mrf.mxu0
    %v648 = vadd.f32 0.0, %v647
    %649 = vmatprep.mubr.bf16.mxu0 0
    %650 = vmatmul.mubr.bf16.gmra.mxu0 %v284
    %v651 = vpop.f32.mrf.mxu0
    %v652 = vadd.f32 0.0, %v651
    %v653 = vpop.f32.mrf.mxu0
    %v654 = vadd.f32 0.0, %v653
    %v655 = vpop.f32.mrf.mxu0
    %v656 = vadd.f32 0.0, %v655
    %v657 = vpop.f32.mrf.mxu0
    %v658 = vadd.f32 0.0, %v657
    %659 = vmatprep.mubr.bf16.mxu0 0
    %660 = vmatmul.mubr.bf16.gmra.mxu0 %v285
    %v661 = vpop.f32.mrf.mxu0
    %v662 = vadd.f32 0.0, %v661
    %v663 = vpop.f32.mrf.mxu0
    %v664 = vadd.f32 0.0, %v663
    %v665 = vpop.f32.mrf.mxu0
    %v666 = vadd.f32 0.0, %v665
    %v667 = vpop.f32.mrf.mxu0
    %v668 = vadd.f32 0.0, %v667
    %669 = vmatprep.mubr.bf16.mxu0 0
    %670 = vmatmul.mubr.bf16.gmra.mxu0 %v286
    %v671 = vpop.f32.mrf.mxu0
    %v672 = vadd.f32 0.0, %v671
    %v673 = vpop.f32.mrf.mxu0
    %v674 = vadd.f32 0.0, %v673
    %v675 = vpop.f32.mrf.mxu0
    %v676 = vadd.f32 0.0, %v675
    %v677 = vpop.f32.mrf.mxu0
    %v678 = vadd.f32 0.0, %v677
    %679 = vmatprep.mubr.bf16.mxu0 0
    %680 = vmatmul.mubr.bf16.gmra.mxu0 %v287
    %v681 = vpop.f32.mrf.mxu0
    %v682 = vadd.f32 0.0, %v681
    %v683 = vpop.f32.mrf.mxu0
    %v684 = vadd.f32 0.0, %v683
    %v685 = vpop.f32.mrf.mxu0
    %v686 = vadd.f32 0.0, %v685
    %v687 = vpop.f32.mrf.mxu0
    %v688 = vadd.f32 0.0, %v687
    %689 = vmatprep.mubr.bf16.mxu0 0
    %690 = vmatmul.mubr.bf16.gmra.mxu0 %v288
    %v691 = vpop.f32.mrf.mxu0
    %v692 = vadd.f32 0.0, %v691
    %v693 = vpop.f32.mrf.mxu0
    %v694 = vadd.f32 0.0, %v693
    %v695 = vpop.f32.mrf.mxu0
    %v696 = vadd.f32 0.0, %v695
    %v697 = vpop.f32.mrf.mxu0
    %v698 = vadd.f32 0.0, %v697
    %699 = vmatprep.mubr.bf16.mxu0 0
    %700 = vmatmul.mubr.bf16.gmra.mxu0 %v289
    %v701 = vpop.f32.mrf.mxu0
    %v702 = vadd.f32 0.0, %v701
    %v703 = vpop.f32.mrf.mxu0
    %v704 = vadd.f32 0.0, %v703
    %v705 = vpop.f32.mrf.mxu0
    %v706 = vadd.f32 0.0, %v705
    %v707 = vpop.f32.mrf.mxu0
    %v708 = vadd.f32 0.0, %v707
    %709 = vmatprep.mubr.bf16.mxu0 0
    %710 = vmatmul.mubr.bf16.gmra.mxu0 %v290
    %v711 = vpop.f32.mrf.mxu0
    %v712 = vadd.f32 0.0, %v711
    %v713 = vpop.f32.mrf.mxu0
    %v714 = vadd.f32 0.0, %v713
    %v715 = vpop.f32.mrf.mxu0
    %v716 = vadd.f32 0.0, %v715
    %v717 = vpop.f32.mrf.mxu0
    %v718 = vadd.f32 0.0, %v717
    %719 = vmatprep.mubr.bf16.mxu0 0
    %720 = vmatmul.mubr.bf16.gmra.mxu0 %v291
    %v721 = vpop.f32.mrf.mxu0
    %v722 = vadd.f32 0.0, %v721
    %v723 = vpop.f32.mrf.mxu0
    %v724 = vadd.f32 0.0, %v723
    %v725 = vpop.f32.mrf.mxu0
    %v726 = vadd.f32 0.0, %v725
    %v727 = vpop.f32.mrf.mxu0
    %v728 = vadd.f32 0.0, %v727
    %729 = vmatprep.mubr.bf16.mxu0 0
    %730 = vmatmul.mubr.bf16.gmra.mxu0 %v292
    %v731 = vpop.f32.mrf.mxu0
    %v732 = vadd.f32 0.0, %v731
    %v733 = vpop.f32.mrf.mxu0
    %v734 = vadd.f32 0.0, %v733
    %v735 = vpop.f32.mrf.mxu0
    %v736 = vadd.f32 0.0, %v735
    %v737 = vpop.f32.mrf.mxu0
    %v738 = vadd.f32 0.0, %v737
    %739 = vmatprep.mubr.bf16.mxu0 0
    %740 = vmatmul.mubr.bf16.gmra.mxu0 %v293
    %v741 = vpop.f32.mrf.mxu0
    %v742 = vadd.f32 0.0, %v741
    %v743 = vpop.f32.mrf.mxu0
    %v744 = vadd.f32 0.0, %v743
    %v745 = vpop.f32.mrf.mxu0
    %v746 = vadd.f32 0.0, %v745
    %v747 = vpop.f32.mrf.mxu0
    %v748 = vadd.f32 0.0, %v747
    %749 = vmatprep.mubr.bf16.mxu0 0
    %750 = vmatmul.mubr.bf16.gmra.mxu0 %v294
    %v751 = vpop.f32.mrf.mxu0
    %v752 = vadd.f32 0.0, %v751
    %v753 = vpop.f32.mrf.mxu0
    %v754 = vadd.f32 0.0, %v753
    %v755 = vpop.f32.mrf.mxu0
    %v756 = vadd.f32 0.0, %v755
    %v757 = vpop.f32.mrf.mxu0
    %v758 = vadd.f32 0.0, %v757
    %759 = vdwg.mxu0
    %v760 = vld [vmem:[#allocation7] ss:$2 sm:$0x3]
    %v762 = vlaneseq
    %v763 = vshrl.u32 %v762, 7
    %v764 = vsub.s32 0, %v763
    %v765 = vrot.slane %v760, %v764
    %v766 = vlaneseq
    %v767 = vshrl.u32 %v766, 7
    %v768 = vsub.s32 1, %v767
    %v769 = vrot.slane %v760, %v768
    %v772 = vmul.f32 %v442, %v765
    %v773 = vmul.f32 %v444, %v769
    %v774 = vmul.f32 %v446, %v765
    %v775 = vmul.f32 %v448, %v769
    %v776 = vmul.f32 %v452, %v765
    %v777 = vmul.f32 %v454, %v769
    %v778 = vmul.f32 %v456, %v765
    %v779 = vmul.f32 %v458, %v769
    %v780 = vmul.f32 %v462, %v765
    %v781 = vmul.f32 %v464, %v769
    %v782 = vmul.f32 %v466, %v765
    %v783 = vmul.f32 %v468, %v769
    %v784 = vmul.f32 %v472, %v765
    %v785 = vmul.f32 %v474, %v769
    %v786 = vmul.f32 %v476, %v765
    %v787 = vmul.f32 %v478, %v769
    %v788 = vmul.f32 %v482, %v765
    %v789 = vmul.f32 %v484, %v769
    %v790 = vmul.f32 %v486, %v765
    %v791 = vmul.f32 %v488, %v769
    %v792 = vmul.f32 %v492, %v765
    %v793 = vmul.f32 %v494, %v769
    %v794 = vmul.f32 %v496, %v765
    %v795 = vmul.f32 %v498, %v769
    %v796 = vmul.f32 %v502, %v765
    %v797 = vmul.f32 %v504, %v769
    %v798 = vmul.f32 %v506, %v765
    %v799 = vmul.f32 %v508, %v769
    %v800 = vmul.f32 %v512, %v765
    %v801 = vmul.f32 %v514, %v769
    %v802 = vmul.f32 %v516, %v765
    %v803 = vmul.f32 %v518, %v769
    %v804 = vmul.f32 %v522, %v765
    %v805 = vmul.f32 %v524, %v769
    %v806 = vmul.f32 %v526, %v765
    %v807 = vmul.f32 %v528, %v769
    %v808 = vmul.f32 %v532, %v765
    %v809 = vmul.f32 %v534, %v769
    %v810 = vmul.f32 %v536, %v765
    %v811 = vmul.f32 %v538, %v769
    %v812 = vmul.f32 %v542, %v765
    %v813 = vmul.f32 %v544, %v769
    %v814 = vmul.f32 %v546, %v765
    %v815 = vmul.f32 %v548, %v769
    %v816 = vmul.f32 %v552, %v765
    %v817 = vmul.f32 %v554, %v769
    %v818 = vmul.f32 %v556, %v765
    %v819 = vmul.f32 %v558, %v769
    %v820 = vmul.f32 %v562, %v765
    %v821 = vmul.f32 %v564, %v769
    %v822 = vmul.f32 %v566, %v765
    %v823 = vmul.f32 %v568, %v769
    %v824 = vmul.f32 %v572, %v765
    %v825 = vmul.f32 %v574, %v769
    %v826 = vmul.f32 %v576, %v765
    %v827 = vmul.f32 %v578, %v769
    %v828 = vmul.f32 %v582, %v765
    %v829 = vmul.f32 %v584, %v769
    %v830 = vmul.f32 %v586, %v765
    %v831 = vmul.f32 %v588, %v769
    %v832 = vmul.f32 %v592, %v765
    %v833 = vmul.f32 %v594, %v769
    %v834 = vmul.f32 %v596, %v765
    %v835 = vmul.f32 %v598, %v769
    %v836 = vmul.f32 %v602, %v765
    %v837 = vmul.f32 %v604, %v769
    %v838 = vmul.f32 %v606, %v765
    %v839 = vmul.f32 %v608, %v769
    %v840 = vmul.f32 %v612, %v765
    %v841 = vmul.f32 %v614, %v769
    %v842 = vmul.f32 %v616, %v765
    %v843 = vmul.f32 %v618, %v769
    %v844 = vmul.f32 %v622, %v765
    %v845 = vmul.f32 %v624, %v769
    %v846 = vmul.f32 %v626, %v765
    %v847 = vmul.f32 %v628, %v769
    %v848 = vmul.f32 %v632, %v765
    %v849 = vmul.f32 %v634, %v769
    %v850 = vmul.f32 %v636, %v765
    %v851 = vmul.f32 %v638, %v769
    %v852 = vmul.f32 %v642, %v765
    %v853 = vmul.f32 %v644, %v769
    %v854 = vmul.f32 %v646, %v765
    %v855 = vmul.f32 %v648, %v769
    %v856 = vmul.f32 %v652, %v765
    %v857 = vmul.f32 %v654, %v769
    %v858 = vmul.f32 %v656, %v765
    %v859 = vmul.f32 %v658, %v769
    %v860 = vmul.f32 %v662, %v765
    %v861 = vmul.f32 %v664, %v769
    %v862 = vmul.f32 %v666, %v765
    %v863 = vmul.f32 %v668, %v769
    %v864 = vmul.f32 %v672, %v765
    %v865 = vmul.f32 %v674, %v769
    %v866 = vmul.f32 %v676, %v765
    %v867 = vmul.f32 %v678, %v769
    %v868 = vmul.f32 %v682, %v765
    %v869 = vmul.f32 %v684, %v769
    %v870 = vmul.f32 %v686, %v765
    %v871 = vmul.f32 %v688, %v769
    %v872 = vmul.f32 %v692, %v765
    %v873 = vmul.f32 %v694, %v769
    %v874 = vmul.f32 %v696, %v765
    %v875 = vmul.f32 %v698, %v769
    %v876 = vmul.f32 %v702, %v765
    %v877 = vmul.f32 %v704, %v769
    %v878 = vmul.f32 %v706, %v765
    %v879 = vmul.f32 %v708, %v769
    %v880 = vmul.f32 %v712, %v765
    %v881 = vmul.f32 %v714, %v769
    %v882 = vmul.f32 %v716, %v765
    %v883 = vmul.f32 %v718, %v769
    %v884 = vmul.f32 %v722, %v765
    %v885 = vmul.f32 %v724, %v769
    %v886 = vmul.f32 %v726, %v765
    %v887 = vmul.f32 %v728, %v769
    %v888 = vmul.f32 %v732, %v765
    %v889 = vmul.f32 %v734, %v769
    %v890 = vmul.f32 %v736, %v765
    %v891 = vmul.f32 %v738, %v769
    %v892 = vmul.f32 %v742, %v765
    %v893 = vmul.f32 %v744, %v769
    %v894 = vmul.f32 %v746, %v765
    %v895 = vmul.f32 %v748, %v769
    %v896 = vmul.f32 %v752, %v765
    %v897 = vmul.f32 %v754, %v769
    %v898 = vmul.f32 %v756, %v765
    %v899 = vmul.f32 %v758, %v769
    %s900 = scalar_lea.vmem [#allocation7], 1
    %v901 = vld [vmem:[%s900] ss:$2 sm:$0x3]
    %v903 = vlaneseq
    %v904 = vshrl.u32 %v903, 7
    %v905 = vsub.s32 0, %v904
    %v906 = vrot.slane %v901, %v905
    %v907 = vlaneseq
    %v908 = vshrl.u32 %v907, 7
    %v909 = vsub.s32 1, %v908
    %v910 = vrot.slane %v901, %v909
    %v913 = vadd.f32 %v772, %v906
    %v914 = vadd.f32 %v773, %v910
    %v915 = vadd.f32 %v774, %v906
    %v916 = vadd.f32 %v775, %v910
    %v917 = vadd.f32 %v776, %v906
    %v918 = vadd.f32 %v777, %v910
    %v919 = vadd.f32 %v778, %v906
    %v920 = vadd.f32 %v779, %v910
    %v921 = vadd.f32 %v780, %v906
    %v922 = vadd.f32 %v781, %v910
    %v923 = vadd.f32 %v782, %v906
    %v924 = vadd.f32 %v783, %v910
    %v925 = vadd.f32 %v784, %v906
    %v926 = vadd.f32 %v785, %v910
    %v927 = vadd.f32 %v786, %v906
    %v928 = vadd.f32 %v787, %v910
    %v929 = vadd.f32 %v788, %v906
    %v930 = vadd.f32 %v789, %v910
    %v931 = vadd.f32 %v790, %v906
    %v932 = vadd.f32 %v791, %v910
    %v933 = vadd.f32 %v792, %v906
    %v934 = vadd.f32 %v793, %v910
    %v935 = vadd.f32 %v794, %v906
    %v936 = vadd.f32 %v795, %v910
    %v937 = vadd.f32 %v796, %v906
    %v938 = vadd.f32 %v797, %v910
    %v939 = vadd.f32 %v798, %v906
    %v940 = vadd.f32 %v799, %v910
    %v941 = vadd.f32 %v800, %v906
    %v942 = vadd.f32 %v801, %v910
    %v943 = vadd.f32 %v802, %v906
    %v944 = vadd.f32 %v803, %v910
    %v945 = vadd.f32 %v804, %v906
    %v946 = vadd.f32 %v805, %v910
    %v947 = vadd.f32 %v806, %v906
    %v948 = vadd.f32 %v807, %v910
    %v949 = vadd.f32 %v808, %v906
    %v950 = vadd.f32 %v809, %v910
    %v951 = vadd.f32 %v810, %v906
    %v952 = vadd.f32 %v811, %v910
    %v953 = vadd.f32 %v812, %v906
    %v954 = vadd.f32 %v813, %v910
    %v955 = vadd.f32 %v814, %v906
    %v956 = vadd.f32 %v815, %v910
    %v957 = vadd.f32 %v816, %v906
    %v958 = vadd.f32 %v817, %v910
    %v959 = vadd.f32 %v818, %v906
    %v960 = vadd.f32 %v819, %v910
    %v961 = vadd.f32 %v820, %v906
    %v962 = vadd.f32 %v821, %v910
    %v963 = vadd.f32 %v822, %v906
    %v964 = vadd.f32 %v823, %v910
    %v965 = vadd.f32 %v824, %v906
    %v966 = vadd.f32 %v825, %v910
    %v967 = vadd.f32 %v826, %v906
    %v968 = vadd.f32 %v827, %v910
    %v969 = vadd.f32 %v828, %v906
    %v970 = vadd.f32 %v829, %v910
    %v971 = vadd.f32 %v830, %v906
    %v972 = vadd.f32 %v831, %v910
    %v973 = vadd.f32 %v832, %v906
    %v974 = vadd.f32 %v833, %v910
    %v975 = vadd.f32 %v834, %v906
    %v976 = vadd.f32 %v835, %v910
    %v977 = vadd.f32 %v836, %v906
    %v978 = vadd.f32 %v837, %v910
    %v979 = vadd.f32 %v838, %v906
    %v980 = vadd.f32 %v839, %v910
    %v981 = vadd.f32 %v840, %v906
    %v982 = vadd.f32 %v841, %v910
    %v983 = vadd.f32 %v842, %v906
    %v984 = vadd.f32 %v843, %v910
    %v985 = vadd.f32 %v844, %v906
    %v986 = vadd.f32 %v845, %v910
    %v987 = vadd.f32 %v846, %v906
    %v988 = vadd.f32 %v847, %v910
    %v989 = vadd.f32 %v848, %v906
    %v990 = vadd.f32 %v849, %v910
    %v991 = vadd.f32 %v850, %v906
    %v992 = vadd.f32 %v851, %v910
    %v993 = vadd.f32 %v852, %v906
    %v994 = vadd.f32 %v853, %v910
    %v995 = vadd.f32 %v854, %v906
    %v996 = vadd.f32 %v855, %v910
    %v997 = vadd.f32 %v856, %v906
    %v998 = vadd.f32 %v857, %v910
    %v999 = vadd.f32 %v858, %v906
    %v1000 = vadd.f32 %v859, %v910
    %v1001 = vadd.f32 %v860, %v906
    %v1002 = vadd.f32 %v861, %v910
    %v1003 = vadd.f32 %v862, %v906
    %v1004 = vadd.f32 %v863, %v910
    %v1005 = vadd.f32 %v864, %v906
    %v1006 = vadd.f32 %v865, %v910
    %v1007 = vadd.f32 %v866, %v906
    %v1008 = vadd.f32 %v867, %v910
    %v1009 = vadd.f32 %v868, %v906
    %v1010 = vadd.f32 %v869, %v910
    %v1011 = vadd.f32 %v870, %v906
    %v1012 = vadd.f32 %v871, %v910
    %v1013 = vadd.f32 %v872, %v906
    %v1014 = vadd.f32 %v873, %v910
    %v1015 = vadd.f32 %v874, %v906
    %v1016 = vadd.f32 %v875, %v910
    %v1017 = vadd.f32 %v876, %v906
    %v1018 = vadd.f32 %v877, %v910
    %v1019 = vadd.f32 %v878, %v906
    %v1020 = vadd.f32 %v879, %v910
    %v1021 = vadd.f32 %v880, %v906
    %v1022 = vadd.f32 %v881, %v910
    %v1023 = vadd.f32 %v882, %v906
    %v1024 = vadd.f32 %v883, %v910
    %v1025 = vadd.f32 %v884, %v906
    %v1026 = vadd.f32 %v885, %v910
    %v1027 = vadd.f32 %v886, %v906
    %v1028 = vadd.f32 %v887, %v910
    %v1029 = vadd.f32 %v888, %v906
    %v1030 = vadd.f32 %v889, %v910
    %v1031 = vadd.f32 %v890, %v906
    %v1032 = vadd.f32 %v891, %v910
    %v1033 = vadd.f32 %v892, %v906
    %v1034 = vadd.f32 %v893, %v910
    %v1035 = vadd.f32 %v894, %v906
    %v1036 = vadd.f32 %v895, %v910
    %v1037 = vadd.f32 %v896, %v906
    %v1038 = vadd.f32 %v897, %v910
    %v1039 = vadd.f32 %v898, %v906
    %v1040 = vadd.f32 %v899, %v910
    %v1041 = vsub.f32 0.0, %v913
    %v1042 = vsub.f32 0.0, %v914
    %v1043 = vsub.f32 0.0, %v915
    %v1044 = vsub.f32 0.0, %v916
    %v1045 = vsub.f32 0.0, %v917
    %v1046 = vsub.f32 0.0, %v918
    %v1047 = vsub.f32 0.0, %v919
    %v1048 = vsub.f32 0.0, %v920
    %v1049 = vsub.f32 0.0, %v921
    %v1050 = vsub.f32 0.0, %v922
    %v1051 = vsub.f32 0.0, %v923
    %v1052 = vsub.f32 0.0, %v924
    %v1053 = vsub.f32 0.0, %v925
    %v1054 = vsub.f32 0.0, %v926
    %v1055 = vsub.f32 0.0, %v927
    %v1056 = vsub.f32 0.0, %v928
    %v1057 = vsub.f32 0.0, %v929
    %v1058 = vsub.f32 0.0, %v930
    %v1059 = vsub.f32 0.0, %v931
    %v1060 = vsub.f32 0.0, %v932
    %v1061 = vsub.f32 0.0, %v933
    %v1062 = vsub.f32 0.0, %v934
    %v1063 = vsub.f32 0.0, %v935
    %v1064 = vsub.f32 0.0, %v936
    %v1065 = vsub.f32 0.0, %v937
    %v1066 = vsub.f32 0.0, %v938
    %v1067 = vsub.f32 0.0, %v939
    %v1068 = vsub.f32 0.0, %v940
    %v1069 = vsub.f32 0.0, %v941
    %v1070 = vsub.f32 0.0, %v942
    %v1071 = vsub.f32 0.0, %v943
    %v1072 = vsub.f32 0.0, %v944
    %v1073 = vsub.f32 0.0, %v945
    %v1074 = vsub.f32 0.0, %v946
    %v1075 = vsub.f32 0.0, %v947
    %v1076 = vsub.f32 0.0, %v948
    %v1077 = vsub.f32 0.0, %v949
    %v1078 = vsub.f32 0.0, %v950
    %v1079 = vsub.f32 0.0, %v951
    %v1080 = vsub.f32 0.0, %v952
    %v1081 = vsub.f32 0.0, %v953
    %v1082 = vsub.f32 0.0, %v954
    %v1083 = vsub.f32 0.0, %v955
    %v1084 = vsub.f32 0.0, %v956
    %v1085 = vsub.f32 0.0, %v957
    %v1086 = vsub.f32 0.0, %v958
    %v1087 = vsub.f32 0.0, %v959
    %v1088 = vsub.f32 0.0, %v960
    %v1089 = vsub.f32 0.0, %v961
    %v1090 = vsub.f32 0.0, %v962
    %v1091 = vsub.f32 0.0, %v963
    %v1092 = vsub.f32 0.0, %v964
    %v1093 = vsub.f32 0.0, %v965
    %v1094 = vsub.f32 0.0, %v966
    %v1095 = vsub.f32 0.0, %v967
    %v1096 = vsub.f32 0.0, %v968
    %v1097 = vsub.f32 0.0, %v969
    %v1098 = vsub.f32 0.0, %v970
    %v1099 = vsub.f32 0.0, %v971
    %v1100 = vsub.f32 0.0, %v972
    %v1101 = vsub.f32 0.0, %v973
    %v1102 = vsub.f32 0.0, %v974
    %v1103 = vsub.f32 0.0, %v975
    %v1104 = vsub.f32 0.0, %v976
    %v1105 = vsub.f32 0.0, %v977
    %v1106 = vsub.f32 0.0, %v978
    %v1107 = vsub.f32 0.0, %v979
    %v1108 = vsub.f32 0.0, %v980
    %v1109 = vsub.f32 0.0, %v981
    %v1110 = vsub.f32 0.0, %v982
    %v1111 = vsub.f32 0.0, %v983
    %v1112 = vsub.f32 0.0, %v984
    %v1113 = vsub.f32 0.0, %v985
    %v1114 = vsub.f32 0.0, %v986
    %v1115 = vsub.f32 0.0, %v987
    %v1116 = vsub.f32 0.0, %v988
    %v1117 = vsub.f32 0.0, %v989
    %v1118 = vsub.f32 0.0, %v990
    %v1119 = vsub.f32 0.0, %v991
    %v1120 = vsub.f32 0.0, %v992
    %v1121 = vsub.f32 0.0, %v993
    %v1122 = vsub.f32 0.0, %v994
    %v1123 = vsub.f32 0.0, %v995
    %v1124 = vsub.f32 0.0, %v996
    %v1125 = vsub.f32 0.0, %v997
    %v1126 = vsub.f32 0.0, %v998
    %v1127 = vsub.f32 0.0, %v999
    %v1128 = vsub.f32 0.0, %v1000
    %v1129 = vsub.f32 0.0, %v1001
    %v1130 = vsub.f32 0.0, %v1002
    %v1131 = vsub.f32 0.0, %v1003
    %v1132 = vsub.f32 0.0, %v1004
    %v1133 = vsub.f32 0.0, %v1005
    %v1134 = vsub.f32 0.0, %v1006
    %v1135 = vsub.f32 0.0, %v1007
    %v1136 = vsub.f32 0.0, %v1008
    %v1137 = vsub.f32 0.0, %v1009
    %v1138 = vsub.f32 0.0, %v1010
    %v1139 = vsub.f32 0.0, %v1011
    %v1140 = vsub.f32 0.0, %v1012
    %v1141 = vsub.f32 0.0, %v1013
    %v1142 = vsub.f32 0.0, %v1014
    %v1143 = vsub.f32 0.0, %v1015
    %v1144 = vsub.f32 0.0, %v1016
    %v1145 = vsub.f32 0.0, %v1017
    %v1146 = vsub.f32 0.0, %v1018
    %v1147 = vsub.f32 0.0, %v1019
    %v1148 = vsub.f32 0.0, %v1020
    %v1149 = vsub.f32 0.0, %v1021
    %v1150 = vsub.f32 0.0, %v1022
    %v1151 = vsub.f32 0.0, %v1023
    %v1152 = vsub.f32 0.0, %v1024
    %v1153 = vsub.f32 0.0, %v1025
    %v1154 = vsub.f32 0.0, %v1026
    %v1155 = vsub.f32 0.0, %v1027
    %v1156 = vsub.f32 0.0, %v1028
    %v1157 = vsub.f32 0.0, %v1029
    %v1158 = vsub.f32 0.0, %v1030
    %v1159 = vsub.f32 0.0, %v1031
    %v1160 = vsub.f32 0.0, %v1032
    %v1161 = vsub.f32 0.0, %v1033
    %v1162 = vsub.f32 0.0, %v1034
    %v1163 = vsub.f32 0.0, %v1035
    %v1164 = vsub.f32 0.0, %v1036
    %v1165 = vsub.f32 0.0, %v1037
    %v1166 = vsub.f32 0.0, %v1038
    %v1167 = vsub.f32 0.0, %v1039
    %v1168 = vsub.f32 0.0, %v1040
    %v1169 = vmul.f32 %v1041, 1.442695
    %v1170 = vpow.pop %v1169
    %v1171 = vmul.f32 %v1042, 1.442695
    %v1172 = vpow.pop %v1171
    %v1173 = vmul.f32 %v1043, 1.442695
    %v1174 = vpow.pop %v1173
    %v1175 = vmul.f32 %v1044, 1.442695
    %v1176 = vpow.pop %v1175
    %v1177 = vmul.f32 %v1045, 1.442695
    %v1178 = vpow.pop %v1177
    %v1179 = vmul.f32 %v1046, 1.442695
    %v1180 = vpow.pop %v1179
    %v1181 = vmul.f32 %v1047, 1.442695
    %v1182 = vpow.pop %v1181
    %v1183 = vmul.f32 %v1048, 1.442695
    %v1184 = vpow.pop %v1183
    %v1185 = vmul.f32 %v1049, 1.442695
    %v1186 = vpow.pop %v1185
    %v1187 = vmul.f32 %v1050, 1.442695
    %v1188 = vpow.pop %v1187
    %v1189 = vmul.f32 %v1051, 1.442695
    %v1190 = vpow.pop %v1189
    %v1191 = vmul.f32 %v1052, 1.442695
    %v1192 = vpow.pop %v1191
    %v1193 = vmul.f32 %v1053, 1.442695
    %v1194 = vpow.pop %v1193
    %v1195 = vmul.f32 %v1054, 1.442695
    %v1196 = vpow.pop %v1195
    %v1197 = vmul.f32 %v1055, 1.442695
    %v1198 = vpow.pop %v1197
    %v1199 = vmul.f32 %v1056, 1.442695
    %v1200 = vpow.pop %v1199
    %v1201 = vmul.f32 %v1057, 1.442695
    %v1202 = vpow.pop %v1201
    %v1203 = vmul.f32 %v1058, 1.442695
    %v1204 = vpow.pop %v1203
    %v1205 = vmul.f32 %v1059, 1.442695
    %v1206 = vpow.pop %v1205
    %v1207 = vmul.f32 %v1060, 1.442695
    %v1208 = vpow.pop %v1207
    %v1209 = vmul.f32 %v1061, 1.442695
    %v1210 = vpow.pop %v1209
    %v1211 = vmul.f32 %v1062, 1.442695
    %v1212 = vpow.pop %v1211
    %v1213 = vmul.f32 %v1063, 1.442695
    %v1214 = vpow.pop %v1213
    %v1215 = vmul.f32 %v1064, 1.442695
    %v1216 = vpow.pop %v1215
    %v1217 = vmul.f32 %v1065, 1.442695
    %v1218 = vpow.pop %v1217
    %v1219 = vmul.f32 %v1066, 1.442695
    %v1220 = vpow.pop %v1219
    %v1221 = vmul.f32 %v1067, 1.442695
    %v1222 = vpow.pop %v1221
    %v1223 = vmul.f32 %v1068, 1.442695
    %v1224 = vpow.pop %v1223
    %v1225 = vmul.f32 %v1069, 1.442695
    %v1226 = vpow.pop %v1225
    %v1227 = vmul.f32 %v1070, 1.442695
    %v1228 = vpow.pop %v1227
    %v1229 = vmul.f32 %v1071, 1.442695
    %v1230 = vpow.pop %v1229
    %v1231 = vmul.f32 %v1072, 1.442695
    %v1232 = vpow.pop %v1231
    %v1233 = vmul.f32 %v1073, 1.442695
    %v1234 = vpow.pop %v1233
    %v1235 = vmul.f32 %v1074, 1.442695
    %v1236 = vpow.pop %v1235
    %v1237 = vmul.f32 %v1075, 1.442695
    %v1238 = vpow.pop %v1237
    %v1239 = vmul.f32 %v1076, 1.442695
    %v1240 = vpow.pop %v1239
    %v1241 = vmul.f32 %v1077, 1.442695
    %v1242 = vpow.pop %v1241
    %v1243 = vmul.f32 %v1078, 1.442695
    %v1244 = vpow.pop %v1243
    %v1245 = vmul.f32 %v1079, 1.442695
    %v1246 = vpow.pop %v1245
    %v1247 = vmul.f32 %v1080, 1.442695
    %v1248 = vpow.pop %v1247
    %v1249 = vmul.f32 %v1081, 1.442695
    %v1250 = vpow.pop %v1249
    %v1251 = vmul.f32 %v1082, 1.442695
    %v1252 = vpow.pop %v1251
    %v1253 = vmul.f32 %v1083, 1.442695
    %v1254 = vpow.pop %v1253
    %v1255 = vmul.f32 %v1084, 1.442695
    %v1256 = vpow.pop %v1255
    %v1257 = vmul.f32 %v1085, 1.442695
    %v1258 = vpow.pop %v1257
    %v1259 = vmul.f32 %v1086, 1.442695
    %v1260 = vpow.pop %v1259
    %v1261 = vmul.f32 %v1087, 1.442695
    %v1262 = vpow.pop %v1261
    %v1263 = vmul.f32 %v1088, 1.442695
    %v1264 = vpow.pop %v1263
    %v1265 = vmul.f32 %v1089, 1.442695
    %v1266 = vpow.pop %v1265
    %v1267 = vmul.f32 %v1090, 1.442695
    %v1268 = vpow.pop %v1267
    %v1269 = vmul.f32 %v1091, 1.442695
    %v1270 = vpow.pop %v1269
    %v1271 = vmul.f32 %v1092, 1.442695
    %v1272 = vpow.pop %v1271
    %v1273 = vmul.f32 %v1093, 1.442695
    %v1274 = vpow.pop %v1273
    %v1275 = vmul.f32 %v1094, 1.442695
    %v1276 = vpow.pop %v1275
    %v1277 = vmul.f32 %v1095, 1.442695
    %v1278 = vpow.pop %v1277
    %v1279 = vmul.f32 %v1096, 1.442695
    %v1280 = vpow.pop %v1279
    %v1281 = vmul.f32 %v1097, 1.442695
    %v1282 = vpow.pop %v1281
    %v1283 = vmul.f32 %v1098, 1.442695
    %v1284 = vpow.pop %v1283
    %v1285 = vmul.f32 %v1099, 1.442695
    %v1286 = vpow.pop %v1285
    %v1287 = vmul.f32 %v1100, 1.442695
    %v1288 = vpow.pop %v1287
    %v1289 = vmul.f32 %v1101, 1.442695
    %v1290 = vpow.pop %v1289
    %v1291 = vmul.f32 %v1102, 1.442695
    %v1292 = vpow.pop %v1291
    %v1293 = vmul.f32 %v1103, 1.442695
    %v1294 = vpow.pop %v1293
    %v1295 = vmul.f32 %v1104, 1.442695
    %v1296 = vpow.pop %v1295
    %v1297 = vmul.f32 %v1105, 1.442695
    %v1298 = vpow.pop %v1297
    %v1299 = vmul.f32 %v1106, 1.442695
    %v1300 = vpow.pop %v1299
    %v1301 = vmul.f32 %v1107, 1.442695
    %v1302 = vpow.pop %v1301
    %v1303 = vmul.f32 %v1108, 1.442695
    %v1304 = vpow.pop %v1303
    %v1305 = vmul.f32 %v1109, 1.442695
    %v1306 = vpow.pop %v1305
    %v1307 = vmul.f32 %v1110, 1.442695
    %v1308 = vpow.pop %v1307
    %v1309 = vmul.f32 %v1111, 1.442695
    %v1310 = vpow.pop %v1309
    %v1311 = vmul.f32 %v1112, 1.442695
    %v1312 = vpow.pop %v1311
    %v1313 = vmul.f32 %v1113, 1.442695
    %v1314 = vpow.pop %v1313
    %v1315 = vmul.f32 %v1114, 1.442695
    %v1316 = vpow.pop %v1315
    %v1317 = vmul.f32 %v1115, 1.442695
    %v1318 = vpow.pop %v1317
    %v1319 = vmul.f32 %v1116, 1.442695
    %v1320 = vpow.pop %v1319
    %v1321 = vmul.f32 %v1117, 1.442695
    %v1322 = vpow.pop %v1321
    %v1323 = vmul.f32 %v1118, 1.442695
    %v1324 = vpow.pop %v1323
    %v1325 = vmul.f32 %v1119, 1.442695
    %v1326 = vpow.pop %v1325
    %v1327 = vmul.f32 %v1120, 1.442695
    %v1328 = vpow.pop %v1327
    %v1329 = vmul.f32 %v1121, 1.442695
    %v1330 = vpow.pop %v1329
    %v1331 = vmul.f32 %v1122, 1.442695
    %v1332 = vpow.pop %v1331
    %v1333 = vmul.f32 %v1123, 1.442695
    %v1334 = vpow.pop %v1333
    %v1335 = vmul.f32 %v1124, 1.442695
    %v1336 = vpow.pop %v1335
    %v1337 = vmul.f32 %v1125, 1.442695
    %v1338 = vpow.pop %v1337
    %v1339 = vmul.f32 %v1126, 1.442695
    %v1340 = vpow.pop %v1339
    %v1341 = vmul.f32 %v1127, 1.442695
    %v1342 = vpow.pop %v1341
    %v1343 = vmul.f32 %v1128, 1.442695
    %v1344 = vpow.pop %v1343
    %v1345 = vmul.f32 %v1129, 1.442695
    %v1346 = vpow.pop %v1345
    %v1347 = vmul.f32 %v1130, 1.442695
    %v1348 = vpow.pop %v1347
    %v1349 = vmul.f32 %v1131, 1.442695
    %v1350 = vpow.pop %v1349
    %v1351 = vmul.f32 %v1132, 1.442695
    %v1352 = vpow.pop %v1351
    %v1353 = vmul.f32 %v1133, 1.442695
    %v1354 = vpow.pop %v1353
    %v1355 = vmul.f32 %v1134, 1.442695
    %v1356 = vpow.pop %v1355
    %v1357 = vmul.f32 %v1135, 1.442695
    %v1358 = vpow.pop %v1357
    %v1359 = vmul.f32 %v1136, 1.442695
    %v1360 = vpow.pop %v1359
    %v1361 = vmul.f32 %v1137, 1.442695
    %v1362 = vpow.pop %v1361
    %v1363 = vmul.f32 %v1138, 1.442695
    %v1364 = vpow.pop %v1363
    %v1365 = vmul.f32 %v1139, 1.442695
    %v1366 = vpow.pop %v1365
    %v1367 = vmul.f32 %v1140, 1.442695
    %v1368 = vpow.pop %v1367
    %v1369 = vmul.f32 %v1141, 1.442695
    %v1370 = vpow.pop %v1369
    %v1371 = vmul.f32 %v1142, 1.442695
    %v1372 = vpow.pop %v1371
    %v1373 = vmul.f32 %v1143, 1.442695
    %v1374 = vpow.pop %v1373
    %v1375 = vmul.f32 %v1144, 1.442695
    %v1376 = vpow.pop %v1375
    %v1377 = vmul.f32 %v1145, 1.442695
    %v1378 = vpow.pop %v1377
    %v1379 = vmul.f32 %v1146, 1.442695
    %v1380 = vpow.pop %v1379
    %v1381 = vmul.f32 %v1147, 1.442695
    %v1382 = vpow.pop %v1381
    %v1383 = vmul.f32 %v1148, 1.442695
    %v1384 = vpow.pop %v1383
    %v1385 = vmul.f32 %v1149, 1.442695
    %v1386 = vpow.pop %v1385
    %v1387 = vmul.f32 %v1150, 1.442695
    %v1388 = vpow.pop %v1387
    %v1389 = vmul.f32 %v1151, 1.442695
    %v1390 = vpow.pop %v1389
    %v1391 = vmul.f32 %v1152, 1.442695
    %v1392 = vpow.pop %v1391
    %v1393 = vmul.f32 %v1153, 1.442695
    %v1394 = vpow.pop %v1393
    %v1395 = vmul.f32 %v1154, 1.442695
    %v1396 = vpow.pop %v1395
    %v1397 = vmul.f32 %v1155, 1.442695
    %v1398 = vpow.pop %v1397
    %v1399 = vmul.f32 %v1156, 1.442695
    %v1400 = vpow.pop %v1399
    %v1401 = vmul.f32 %v1157, 1.442695
    %v1402 = vpow.pop %v1401
    %v1403 = vmul.f32 %v1158, 1.442695
    %v1404 = vpow.pop %v1403
    %v1405 = vmul.f32 %v1159, 1.442695
    %v1406 = vpow.pop %v1405
    %v1407 = vmul.f32 %v1160, 1.442695
    %v1408 = vpow.pop %v1407
    %v1409 = vmul.f32 %v1161, 1.442695
    %v1410 = vpow.pop %v1409
    %v1411 = vmul.f32 %v1162, 1.442695
    %v1412 = vpow.pop %v1411
    %v1413 = vmul.f32 %v1163, 1.442695
    %v1414 = vpow.pop %v1413
    %v1415 = vmul.f32 %v1164, 1.442695
    %v1416 = vpow.pop %v1415
    %v1417 = vmul.f32 %v1165, 1.442695
    %v1418 = vpow.pop %v1417
    %v1419 = vmul.f32 %v1166, 1.442695
    %v1420 = vpow.pop %v1419
    %v1421 = vmul.f32 %v1167, 1.442695
    %v1422 = vpow.pop %v1421
    %v1423 = vmul.f32 %v1168, 1.442695
    %v1424 = vpow.pop %v1423
    %v1425 = vadd.f32 %v1170, 1.0
    %v1426 = vadd.f32 %v1172, 1.0
    %v1427 = vadd.f32 %v1174, 1.0
    %v1428 = vadd.f32 %v1176, 1.0
    %v1429 = vadd.f32 %v1178, 1.0
    %v1430 = vadd.f32 %v1180, 1.0
    %v1431 = vadd.f32 %v1182, 1.0
    %v1432 = vadd.f32 %v1184, 1.0
    %v1433 = vadd.f32 %v1186, 1.0
    %v1434 = vadd.f32 %v1188, 1.0
    %v1435 = vadd.f32 %v1190, 1.0
    %v1436 = vadd.f32 %v1192, 1.0
    %v1437 = vadd.f32 %v1194, 1.0
    %v1438 = vadd.f32 %v1196, 1.0
    %v1439 = vadd.f32 %v1198, 1.0
    %v1440 = vadd.f32 %v1200, 1.0
    %v1441 = vadd.f32 %v1202, 1.0
    %v1442 = vadd.f32 %v1204, 1.0
    %v1443 = vadd.f32 %v1206, 1.0
    %v1444 = vadd.f32 %v1208, 1.0
    %v1445 = vadd.f32 %v1210, 1.0
    %v1446 = vadd.f32 %v1212, 1.0
    %v1447 = vadd.f32 %v1214, 1.0
    %v1448 = vadd.f32 %v1216, 1.0
    %v1449 = vadd.f32 %v1218, 1.0
    %v1450 = vadd.f32 %v1220, 1.0
    %v1451 = vadd.f32 %v1222, 1.0
    %v1452 = vadd.f32 %v1224, 1.0
    %v1453 = vadd.f32 %v1226, 1.0
    %v1454 = vadd.f32 %v1228, 1.0
    %v1455 = vadd.f32 %v1230, 1.0
    %v1456 = vadd.f32 %v1232, 1.0
    %v1457 = vadd.f32 %v1234, 1.0
    %v1458 = vadd.f32 %v1236, 1.0
    %v1459 = vadd.f32 %v1238, 1.0
    %v1460 = vadd.f32 %v1240, 1.0
    %v1461 = vadd.f32 %v1242, 1.0
    %v1462 = vadd.f32 %v1244, 1.0
    %v1463 = vadd.f32 %v1246, 1.0
    %v1464 = vadd.f32 %v1248, 1.0
    %v1465 = vadd.f32 %v1250, 1.0
    %v1466 = vadd.f32 %v1252, 1.0
    %v1467 = vadd.f32 %v1254, 1.0
    %v1468 = vadd.f32 %v1256, 1.0
    %v1469 = vadd.f32 %v1258, 1.0
    %v1470 = vadd.f32 %v1260, 1.0
    %v1471 = vadd.f32 %v1262, 1.0
    %v1472 = vadd.f32 %v1264, 1.0
    %v1473 = vadd.f32 %v1266, 1.0
    %v1474 = vadd.f32 %v1268, 1.0
    %v1475 = vadd.f32 %v1270, 1.0
    %v1476 = vadd.f32 %v1272, 1.0
    %v1477 = vadd.f32 %v1274, 1.0
    %v1478 = vadd.f32 %v1276, 1.0
    %v1479 = vadd.f32 %v1278, 1.0
    %v1480 = vadd.f32 %v1280, 1.0
    %v1481 = vadd.f32 %v1282, 1.0
    %v1482 = vadd.f32 %v1284, 1.0
    %v1483 = vadd.f32 %v1286, 1.0
    %v1484 = vadd.f32 %v1288, 1.0
    %v1485 = vadd.f32 %v1290, 1.0
    %v1486 = vadd.f32 %v1292, 1.0
    %v1487 = vadd.f32 %v1294, 1.0
    %v1488 = vadd.f32 %v1296, 1.0
    %v1489 = vadd.f32 %v1298, 1.0
    %v1490 = vadd.f32 %v1300, 1.0
    %v1491 = vadd.f32 %v1302, 1.0
    %v1492 = vadd.f32 %v1304, 1.0
    %v1493 = vadd.f32 %v1306, 1.0
    %v1494 = vadd.f32 %v1308, 1.0
    %v1495 = vadd.f32 %v1310, 1.0
    %v1496 = vadd.f32 %v1312, 1.0
    %v1497 = vadd.f32 %v1314, 1.0
    %v1498 = vadd.f32 %v1316, 1.0
    %v1499 = vadd.f32 %v1318, 1.0
    %v1500 = vadd.f32 %v1320, 1.0
    %v1501 = vadd.f32 %v1322, 1.0
    %v1502 = vadd.f32 %v1324, 1.0
    %v1503 = vadd.f32 %v1326, 1.0
    %v1504 = vadd.f32 %v1328, 1.0
    %v1505 = vadd.f32 %v1330, 1.0
    %v1506 = vadd.f32 %v1332, 1.0
    %v1507 = vadd.f32 %v1334, 1.0
    %v1508 = vadd.f32 %v1336, 1.0
    %v1509 = vadd.f32 %v1338, 1.0
    %v1510 = vadd.f32 %v1340, 1.0
    %v1511 = vadd.f32 %v1342, 1.0
    %v1512 = vadd.f32 %v1344, 1.0
    %v1513 = vadd.f32 %v1346, 1.0
    %v1514 = vadd.f32 %v1348, 1.0
    %v1515 = vadd.f32 %v1350, 1.0
    %v1516 = vadd.f32 %v1352, 1.0
    %v1517 = vadd.f32 %v1354, 1.0
    %v1518 = vadd.f32 %v1356, 1.0
    %v1519 = vadd.f32 %v1358, 1.0
    %v1520 = vadd.f32 %v1360, 1.0
    %v1521 = vadd.f32 %v1362, 1.0
    %v1522 = vadd.f32 %v1364, 1.0
    %v1523 = vadd.f32 %v1366, 1.0
    %v1524 = vadd.f32 %v1368, 1.0
    %v1525 = vadd.f32 %v1370, 1.0
    %v1526 = vadd.f32 %v1372, 1.0
    %v1527 = vadd.f32 %v1374, 1.0
    %v1528 = vadd.f32 %v1376, 1.0
    %v1529 = vadd.f32 %v1378, 1.0
    %v1530 = vadd.f32 %v1380, 1.0
    %v1531 = vadd.f32 %v1382, 1.0
    %v1532 = vadd.f32 %v1384, 1.0
    %v1533 = vadd.f32 %v1386, 1.0
    %v1534 = vadd.f32 %v1388, 1.0
    %v1535 = vadd.f32 %v1390, 1.0
    %v1536 = vadd.f32 %v1392, 1.0
    %v1537 = vadd.f32 %v1394, 1.0
    %v1538 = vadd.f32 %v1396, 1.0
    %v1539 = vadd.f32 %v1398, 1.0
    %v1540 = vadd.f32 %v1400, 1.0
    %v1541 = vadd.f32 %v1402, 1.0
    %v1542 = vadd.f32 %v1404, 1.0
    %v1543 = vadd.f32 %v1406, 1.0
    %v1544 = vadd.f32 %v1408, 1.0
    %v1545 = vadd.f32 %v1410, 1.0
    %v1546 = vadd.f32 %v1412, 1.0
    %v1547 = vadd.f32 %v1414, 1.0
    %v1548 = vadd.f32 %v1416, 1.0
    %v1549 = vadd.f32 %v1418, 1.0
    %v1550 = vadd.f32 %v1420, 1.0
    %v1551 = vadd.f32 %v1422, 1.0
    %v1552 = vadd.f32 %v1424, 1.0
    %v1553 = vrcp.pop %v1425
    %v1554 = vrcp.pop %v1426
    %v1555 = vrcp.pop %v1427
    %v1556 = vrcp.pop %v1428
    %v1557 = vrcp.pop %v1429
    %v1558 = vrcp.pop %v1430
    %v1559 = vrcp.pop %v1431
    %v1560 = vrcp.pop %v1432
    %v1561 = vrcp.pop %v1433
    %v1562 = vrcp.pop %v1434
    %v1563 = vrcp.pop %v1435
    %v1564 = vrcp.pop %v1436
    %v1565 = vrcp.pop %v1437
    %v1566 = vrcp.pop %v1438
    %v1567 = vrcp.pop %v1439
    %v1568 = vrcp.pop %v1440
    %v1569 = vrcp.pop %v1441
    %v1570 = vrcp.pop %v1442
    %v1571 = vrcp.pop %v1443
    %v1572 = vrcp.pop %v1444
    %v1573 = vrcp.pop %v1445
    %v1574 = vrcp.pop %v1446
    %v1575 = vrcp.pop %v1447
    %v1576 = vrcp.pop %v1448
    %v1577 = vrcp.pop %v1449
    %v1578 = vrcp.pop %v1450
    %v1579 = vrcp.pop %v1451
    %v1580 = vrcp.pop %v1452
    %v1581 = vrcp.pop %v1453
    %v1582 = vrcp.pop %v1454
    %v1583 = vrcp.pop %v1455
    %v1584 = vrcp.pop %v1456
    %v1585 = vrcp.pop %v1457
    %v1586 = vrcp.pop %v1458
    %v1587 = vrcp.pop %v1459
    %v1588 = vrcp.pop %v1460
    %v1589 = vrcp.pop %v1461
    %v1590 = vrcp.pop %v1462
    %v1591 = vrcp.pop %v1463
    %v1592 = vrcp.pop %v1464
    %v1593 = vrcp.pop %v1465
    %v1594 = vrcp.pop %v1466
    %v1595 = vrcp.pop %v1467
    %v1596 = vrcp.pop %v1468
    %v1597 = vrcp.pop %v1469
    %v1598 = vrcp.pop %v1470
    %v1599 = vrcp.pop %v1471
    %v1600 = vrcp.pop %v1472
    %v1601 = vrcp.pop %v1473
    %v1602 = vrcp.pop %v1474
    %v1603 = vrcp.pop %v1475
    %v1604 = vrcp.pop %v1476
    %v1605 = vrcp.pop %v1477
    %v1606 = vrcp.pop %v1478
    %v1607 = vrcp.pop %v1479
    %v1608 = vrcp.pop %v1480
    %v1609 = vrcp.pop %v1481
    %v1610 = vrcp.pop %v1482
    %v1611 = vrcp.pop %v1483
    %v1612 = vrcp.pop %v1484
    %v1613 = vrcp.pop %v1485
    %v1614 = vrcp.pop %v1486
    %v1615 = vrcp.pop %v1487
    %v1616 = vrcp.pop %v1488
    %v1617 = vrcp.pop %v1489
    %v1618 = vrcp.pop %v1490
    %v1619 = vrcp.pop %v1491
    %v1620 = vrcp.pop %v1492
    %v1621 = vrcp.pop %v1493
    %v1622 = vrcp.pop %v1494
    %v1623 = vrcp.pop %v1495
    %v1624 = vrcp.pop %v1496
    %v1625 = vrcp.pop %v1497
    %v1626 = vrcp.pop %v1498
    %v1627 = vrcp.pop %v1499
    %v1628 = vrcp.pop %v1500
    %v1629 = vrcp.pop %v1501
    %v1630 = vrcp.pop %v1502
    %v1631 = vrcp.pop %v1503
    %v1632 = vrcp.pop %v1504
    %v1633 = vrcp.pop %v1505
    %v1634 = vrcp.pop %v1506
    %v1635 = vrcp.pop %v1507
    %v1636 = vrcp.pop %v1508
    %v1637 = vrcp.pop %v1509
    %v1638 = vrcp.pop %v1510
    %v1639 = vrcp.pop %v1511
    %v1640 = vrcp.pop %v1512
    %v1641 = vrcp.pop %v1513
    %v1642 = vrcp.pop %v1514
    %v1643 = vrcp.pop %v1515
    %v1644 = vrcp.pop %v1516
    %v1645 = vrcp.pop %v1517
    %v1646 = vrcp.pop %v1518
    %v1647 = vrcp.pop %v1519
    %v1648 = vrcp.pop %v1520
    %v1649 = vrcp.pop %v1521
    %v1650 = vrcp.pop %v1522
    %v1651 = vrcp.pop %v1523
    %v1652 = vrcp.pop %v1524
    %v1653 = vrcp.pop %v1525
    %v1654 = vrcp.pop %v1526
    %v1655 = vrcp.pop %v1527
    %v1656 = vrcp.pop %v1528
    %v1657 = vrcp.pop %v1529
    %v1658 = vrcp.pop %v1530
    %v1659 = vrcp.pop %v1531
    %v1660 = vrcp.pop %v1532
    %v1661 = vrcp.pop %v1533
    %v1662 = vrcp.pop %v1534
    %v1663 = vrcp.pop %v1535
    %v1664 = vrcp.pop %v1536
    %v1665 = vrcp.pop %v1537
    %v1666 = vrcp.pop %v1538
    %v1667 = vrcp.pop %v1539
    %v1668 = vrcp.pop %v1540
    %v1669 = vrcp.pop %v1541
    %v1670 = vrcp.pop %v1542
    %v1671 = vrcp.pop %v1543
    %v1672 = vrcp.pop %v1544
    %v1673 = vrcp.pop %v1545
    %v1674 = vrcp.pop %v1546
    %v1675 = vrcp.pop %v1547
    %v1676 = vrcp.pop %v1548
    %v1677 = vrcp.pop %v1549
    %v1678 = vrcp.pop %v1550
    %v1679 = vrcp.pop %v1551
    %v1680 = vrcp.pop %v1552
    %v1681 = vmul.f32 %v913, %v1553
    %v1682 = vmul.f32 %v914, %v1554
    %v1683 = vmul.f32 %v915, %v1555
    %v1684 = vmul.f32 %v916, %v1556
    %v1685 = vmul.f32 %v917, %v1557
    %v1686 = vmul.f32 %v918, %v1558
    %v1687 = vmul.f32 %v919, %v1559
    %v1688 = vmul.f32 %v920, %v1560
    %v1689 = vmul.f32 %v921, %v1561
    %v1690 = vmul.f32 %v922, %v1562
    %v1691 = vmul.f32 %v923, %v1563
    %v1692 = vmul.f32 %v924, %v1564
    %v1693 = vmul.f32 %v925, %v1565
    %v1694 = vmul.f32 %v926, %v1566
    %v1695 = vmul.f32 %v927, %v1567
    %v1696 = vmul.f32 %v928, %v1568
    %v1697 = vmul.f32 %v929, %v1569
    %v1698 = vmul.f32 %v930, %v1570
    %v1699 = vmul.f32 %v931, %v1571
    %v1700 = vmul.f32 %v932, %v1572
    %v1701 = vmul.f32 %v933, %v1573
    %v1702 = vmul.f32 %v934, %v1574
    %v1703 = vmul.f32 %v935, %v1575
    %v1704 = vmul.f32 %v936, %v1576
    %v1705 = vmul.f32 %v937, %v1577
    %v1706 = vmul.f32 %v938, %v1578
    %v1707 = vmul.f32 %v939, %v1579
    %v1708 = vmul.f32 %v940, %v1580
    %v1709 = vmul.f32 %v941, %v1581
    %v1710 = vmul.f32 %v942, %v1582
    %v1711 = vmul.f32 %v943, %v1583
    %v1712 = vmul.f32 %v944, %v1584
    %v1713 = vmul.f32 %v945, %v1585
    %v1714 = vmul.f32 %v946, %v1586
    %v1715 = vmul.f32 %v947, %v1587
    %v1716 = vmul.f32 %v948, %v1588
    %v1717 = vmul.f32 %v949, %v1589
    %v1718 = vmul.f32 %v950, %v1590
    %v1719 = vmul.f32 %v951, %v1591
    %v1720 = vmul.f32 %v952, %v1592
    %v1721 = vmul.f32 %v953, %v1593
    %v1722 = vmul.f32 %v954, %v1594
    %v1723 = vmul.f32 %v955, %v1595
    %v1724 = vmul.f32 %v956, %v1596
    %v1725 = vmul.f32 %v957, %v1597
    %v1726 = vmul.f32 %v958, %v1598
    %v1727 = vmul.f32 %v959, %v1599
    %v1728 = vmul.f32 %v960, %v1600
    %v1729 = vmul.f32 %v961, %v1601
    %v1730 = vmul.f32 %v962, %v1602
    %v1731 = vmul.f32 %v963, %v1603
    %v1732 = vmul.f32 %v964, %v1604
    %v1733 = vmul.f32 %v965, %v1605
    %v1734 = vmul.f32 %v966, %v1606
    %v1735 = vmul.f32 %v967, %v1607
    %v1736 = vmul.f32 %v968, %v1608
    %v1737 = vmul.f32 %v969, %v1609
    %v1738 = vmul.f32 %v970, %v1610
    %v1739 = vmul.f32 %v971, %v1611
    %v1740 = vmul.f32 %v972, %v1612
    %v1741 = vmul.f32 %v973, %v1613
    %v1742 = vmul.f32 %v974, %v1614
    %v1743 = vmul.f32 %v975, %v1615
    %v1744 = vmul.f32 %v976, %v1616
    %v1745 = vmul.f32 %v977, %v1617
    %v1746 = vmul.f32 %v978, %v1618
    %v1747 = vmul.f32 %v979, %v1619
    %v1748 = vmul.f32 %v980, %v1620
    %v1749 = vmul.f32 %v981, %v1621
    %v1750 = vmul.f32 %v982, %v1622
    %v1751 = vmul.f32 %v983, %v1623
    %v1752 = vmul.f32 %v984, %v1624
    %v1753 = vmul.f32 %v985, %v1625
    %v1754 = vmul.f32 %v986, %v1626
    %v1755 = vmul.f32 %v987, %v1627
    %v1756 = vmul.f32 %v988, %v1628
    %v1757 = vmul.f32 %v989, %v1629
    %v1758 = vmul.f32 %v990, %v1630
    %v1759 = vmul.f32 %v991, %v1631
    %v1760 = vmul.f32 %v992, %v1632
    %v1761 = vmul.f32 %v993, %v1633
    %v1762 = vmul.f32 %v994, %v1634
    %v1763 = vmul.f32 %v995, %v1635
    %v1764 = vmul.f32 %v996, %v1636
    %v1765 = vmul.f32 %v997, %v1637
    %v1766 = vmul.f32 %v998, %v1638
    %v1767 = vmul.f32 %v999, %v1639
    %v1768 = vmul.f32 %v1000, %v1640
    %v1769 = vmul.f32 %v1001, %v1641
    %v1770 = vmul.f32 %v1002, %v1642
    %v1771 = vmul.f32 %v1003, %v1643
    %v1772 = vmul.f32 %v1004, %v1644
    %v1773 = vmul.f32 %v1005, %v1645
    %v1774 = vmul.f32 %v1006, %v1646
    %v1775 = vmul.f32 %v1007, %v1647
    %v1776 = vmul.f32 %v1008, %v1648
    %v1777 = vmul.f32 %v1009, %v1649
    %v1778 = vmul.f32 %v1010, %v1650
    %v1779 = vmul.f32 %v1011, %v1651
    %v1780 = vmul.f32 %v1012, %v1652
    %v1781 = vmul.f32 %v1013, %v1653
    %v1782 = vmul.f32 %v1014, %v1654
    %v1783 = vmul.f32 %v1015, %v1655
    %v1784 = vmul.f32 %v1016, %v1656
    %v1785 = vmul.f32 %v1017, %v1657
    %v1786 = vmul.f32 %v1018, %v1658
    %v1787 = vmul.f32 %v1019, %v1659
    %v1788 = vmul.f32 %v1020, %v1660
    %v1789 = vmul.f32 %v1021, %v1661
    %v1790 = vmul.f32 %v1022, %v1662
    %v1791 = vmul.f32 %v1023, %v1663
    %v1792 = vmul.f32 %v1024, %v1664
    %v1793 = vmul.f32 %v1025, %v1665
    %v1794 = vmul.f32 %v1026, %v1666
    %v1795 = vmul.f32 %v1027, %v1667
    %v1796 = vmul.f32 %v1028, %v1668
    %v1797 = vmul.f32 %v1029, %v1669
    %v1798 = vmul.f32 %v1030, %v1670
    %v1799 = vmul.f32 %v1031, %v1671
    %v1800 = vmul.f32 %v1032, %v1672
    %v1801 = vmul.f32 %v1033, %v1673
    %v1802 = vmul.f32 %v1034, %v1674
    %v1803 = vmul.f32 %v1035, %v1675
    %v1804 = vmul.f32 %v1036, %v1676
    %v1805 = vmul.f32 %v1037, %v1677
    %v1806 = vmul.f32 %v1038, %v1678
    %v1807 = vmul.f32 %v1039, %v1679
    %v1808 = vmul.f32 %v1040, %v1680
    %v1809 = vpack.c.bf16 %v1683, %v1681
    %v1810 = vpack.c.bf16 %v1684, %v1682
    %v1811 = vpack.c.bf16 %v1687, %v1685
    %v1812 = vpack.c.bf16 %v1688, %v1686
    %v1813 = vpack.c.bf16 %v1691, %v1689
    %v1814 = vpack.c.bf16 %v1692, %v1690
    %v1815 = vpack.c.bf16 %v1695, %v1693
    %v1816 = vpack.c.bf16 %v1696, %v1694
    %v1817 = vpack.c.bf16 %v1699, %v1697
    %v1818 = vpack.c.bf16 %v1700, %v1698
    %v1819 = vpack.c.bf16 %v1703, %v1701
    %v1820 = vpack.c.bf16 %v1704, %v1702
    %v1821 = vpack.c.bf16 %v1707, %v1705
    %v1822 = vpack.c.bf16 %v1708, %v1706
    %v1823 = vpack.c.bf16 %v1711, %v1709
    %v1824 = vpack.c.bf16 %v1712, %v1710
    %v1825 = vpack.c.bf16 %v1715, %v1713
    %v1826 = vpack.c.bf16 %v1716, %v1714
    %v1827 = vpack.c.bf16 %v1719, %v1717
    %v1828 = vpack.c.bf16 %v1720, %v1718
    %v1829 = vpack.c.bf16 %v1723, %v1721
    %v1830 = vpack.c.bf16 %v1724, %v1722
    %v1831 = vpack.c.bf16 %v1727, %v1725
    %v1832 = vpack.c.bf16 %v1728, %v1726
    %v1833 = vpack.c.bf16 %v1731, %v1729
    %v1834 = vpack.c.bf16 %v1732, %v1730
    %v1835 = vpack.c.bf16 %v1735, %v1733
    %v1836 = vpack.c.bf16 %v1736, %v1734
    %v1837 = vpack.c.bf16 %v1739, %v1737
    %v1838 = vpack.c.bf16 %v1740, %v1738
    %v1839 = vpack.c.bf16 %v1743, %v1741
    %v1840 = vpack.c.bf16 %v1744, %v1742
    %v1841 = vpack.c.bf16 %v1747, %v1745
    %v1842 = vpack.c.bf16 %v1748, %v1746
    %v1843 = vpack.c.bf16 %v1751, %v1749
    %v1844 = vpack.c.bf16 %v1752, %v1750
    %v1845 = vpack.c.bf16 %v1755, %v1753
    %v1846 = vpack.c.bf16 %v1756, %v1754
    %v1847 = vpack.c.bf16 %v1759, %v1757
    %v1848 = vpack.c.bf16 %v1760, %v1758
    %v1849 = vpack.c.bf16 %v1763, %v1761
    %v1850 = vpack.c.bf16 %v1764, %v1762
    %v1851 = vpack.c.bf16 %v1767, %v1765
    %v1852 = vpack.c.bf16 %v1768, %v1766
    %v1853 = vpack.c.bf16 %v1771, %v1769
    %v1854 = vpack.c.bf16 %v1772, %v1770
    %v1855 = vpack.c.bf16 %v1775, %v1773
    %v1856 = vpack.c.bf16 %v1776, %v1774
    %v1857 = vpack.c.bf16 %v1779, %v1777
    %v1858 = vpack.c.bf16 %v1780, %v1778
    %v1859 = vpack.c.bf16 %v1783, %v1781
    %v1860 = vpack.c.bf16 %v1784, %v1782
    %v1861 = vpack.c.bf16 %v1787, %v1785
    %v1862 = vpack.c.bf16 %v1788, %v1786
    %v1863 = vpack.c.bf16 %v1791, %v1789
    %v1864 = vpack.c.bf16 %v1792, %v1790
    %v1865 = vpack.c.bf16 %v1795, %v1793
    %v1866 = vpack.c.bf16 %v1796, %v1794
    %v1867 = vpack.c.bf16 %v1799, %v1797
    %v1868 = vpack.c.bf16 %v1800, %v1798
    %v1869 = vpack.c.bf16 %v1803, %v1801
    %v1870 = vpack.c.bf16 %v1804, %v1802
    %v1871 = vpack.c.bf16 %v1807, %v1805
    %v1872 = vpack.c.bf16 %v1808, %v1806
    %v1937 = vunpack.c.l.b16 %v1809
    %v1938 = vunpack.c.l.b16 %v1810
    %v1939 = vunpack.c.h.b16 %v1809
    %v1940 = vunpack.c.h.b16 %v1810
    %v1941 = vunpack.c.l.b16 %v1811
    %v1942 = vunpack.c.l.b16 %v1812
    %v1943 = vunpack.c.h.b16 %v1811
    %v1944 = vunpack.c.h.b16 %v1812
    %v1945 = vunpack.c.l.b16 %v1813
    %v1946 = vunpack.c.l.b16 %v1814
    %v1947 = vunpack.c.h.b16 %v1813
    %v1948 = vunpack.c.h.b16 %v1814
    %v1949 = vunpack.c.l.b16 %v1815
    %v1950 = vunpack.c.l.b16 %v1816
    %v1951 = vunpack.c.h.b16 %v1815
    %v1952 = vunpack.c.h.b16 %v1816
    %v1953 = vunpack.c.l.b16 %v1817
    %v1954 = vunpack.c.l.b16 %v1818
    %v1955 = vunpack.c.h.b16 %v1817
    %v1956 = vunpack.c.h.b16 %v1818
    %v1957 = vunpack.c.l.b16 %v1819
    %v1958 = vunpack.c.l.b16 %v1820
    %v1959 = vunpack.c.h.b16 %v1819
    %v1960 = vunpack.c.h.b16 %v1820
    %v1961 = vunpack.c.l.b16 %v1821
    %v1962 = vunpack.c.l.b16 %v1822
    %v1963 = vunpack.c.h.b16 %v1821
    %v1964 = vunpack.c.h.b16 %v1822
    %v1965 = vunpack.c.l.b16 %v1823
    %v1966 = vunpack.c.l.b16 %v1824
    %v1967 = vunpack.c.h.b16 %v1823
    %v1968 = vunpack.c.h.b16 %v1824
    %v1969 = vunpack.c.l.b16 %v1825
    %v1970 = vunpack.c.l.b16 %v1826
    %v1971 = vunpack.c.h.b16 %v1825
    %v1972 = vunpack.c.h.b16 %v1826
    %v1973 = vunpack.c.l.b16 %v1827
    %v1974 = vunpack.c.l.b16 %v1828
    %v1975 = vunpack.c.h.b16 %v1827
    %v1976 = vunpack.c.h.b16 %v1828
    %v1977 = vunpack.c.l.b16 %v1829
    %v1978 = vunpack.c.l.b16 %v1830
    %v1979 = vunpack.c.h.b16 %v1829
    %v1980 = vunpack.c.h.b16 %v1830
    %v1981 = vunpack.c.l.b16 %v1831
    %v1982 = vunpack.c.l.b16 %v1832
    %v1983 = vunpack.c.h.b16 %v1831
    %v1984 = vunpack.c.h.b16 %v1832
    %v1985 = vunpack.c.l.b16 %v1833
    %v1986 = vunpack.c.l.b16 %v1834
    %v1987 = vunpack.c.h.b16 %v1833
    %v1988 = vunpack.c.h.b16 %v1834
    %v1989 = vunpack.c.l.b16 %v1835
    %v1990 = vunpack.c.l.b16 %v1836
    %v1991 = vunpack.c.h.b16 %v1835
    %v1992 = vunpack.c.h.b16 %v1836
    %v1993 = vunpack.c.l.b16 %v1837
    %v1994 = vunpack.c.l.b16 %v1838
    %v1995 = vunpack.c.h.b16 %v1837
    %v1996 = vunpack.c.h.b16 %v1838
    %v1997 = vunpack.c.l.b16 %v1839
    %v1998 = vunpack.c.l.b16 %v1840
    %v1999 = vunpack.c.h.b16 %v1839
    %v2000 = vunpack.c.h.b16 %v1840
    %v2001 = vunpack.c.l.b16 %v1841
    %v2002 = vunpack.c.l.b16 %v1842
    %v2003 = vunpack.c.h.b16 %v1841
    %v2004 = vunpack.c.h.b16 %v1842
    %v2005 = vunpack.c.l.b16 %v1843
    %v2006 = vunpack.c.l.b16 %v1844
    %v2007 = vunpack.c.h.b16 %v1843
    %v2008 = vunpack.c.h.b16 %v1844
    %v2009 = vunpack.c.l.b16 %v1845
    %v2010 = vunpack.c.l.b16 %v1846
    %v2011 = vunpack.c.h.b16 %v1845
    %v2012 = vunpack.c.h.b16 %v1846
    %v2013 = vunpack.c.l.b16 %v1847
    %v2014 = vunpack.c.l.b16 %v1848
    %v2015 = vunpack.c.h.b16 %v1847
    %v2016 = vunpack.c.h.b16 %v1848
    %v2017 = vunpack.c.l.b16 %v1849
    %v2018 = vunpack.c.l.b16 %v1850
    %v2019 = vunpack.c.h.b16 %v1849
    %v2020 = vunpack.c.h.b16 %v1850
    %v2021 = vunpack.c.l.b16 %v1851
    %v2022 = vunpack.c.l.b16 %v1852
    %v2023 = vunpack.c.h.b16 %v1851
    %v2024 = vunpack.c.h.b16 %v1852
    %v2025 = vunpack.c.l.b16 %v1853
    %v2026 = vunpack.c.l.b16 %v1854
    %v2027 = vunpack.c.h.b16 %v1853
    %v2028 = vunpack.c.h.b16 %v1854
    %v2029 = vunpack.c.l.b16 %v1855
    %v2030 = vunpack.c.l.b16 %v1856
    %v2031 = vunpack.c.h.b16 %v1855
    %v2032 = vunpack.c.h.b16 %v1856
    %v2033 = vunpack.c.l.b16 %v1857
    %v2034 = vunpack.c.l.b16 %v1858
    %v2035 = vunpack.c.h.b16 %v1857
    %v2036 = vunpack.c.h.b16 %v1858
    %v2037 = vunpack.c.l.b16 %v1859
    %v2038 = vunpack.c.l.b16 %v1860
    %v2039 = vunpack.c.h.b16 %v1859
    %v2040 = vunpack.c.h.b16 %v1860
    %v2041 = vunpack.c.l.b16 %v1861
    %v2042 = vunpack.c.l.b16 %v1862
    %v2043 = vunpack.c.h.b16 %v1861
    %v2044 = vunpack.c.h.b16 %v1862
    %v2045 = vunpack.c.l.b16 %v1863
    %v2046 = vunpack.c.l.b16 %v1864
    %v2047 = vunpack.c.h.b16 %v1863
    %v2048 = vunpack.c.h.b16 %v1864
    %v2049 = vunpack.c.l.b16 %v1865
    %v2050 = vunpack.c.l.b16 %v1866
    %v2051 = vunpack.c.h.b16 %v1865
    %v2052 = vunpack.c.h.b16 %v1866
    %v2053 = vunpack.c.l.b16 %v1867
    %v2054 = vunpack.c.l.b16 %v1868
    %v2055 = vunpack.c.h.b16 %v1867
    %v2056 = vunpack.c.h.b16 %v1868
    %v2057 = vunpack.c.l.b16 %v1869
    %v2058 = vunpack.c.l.b16 %v1870
    %v2059 = vunpack.c.h.b16 %v1869
    %v2060 = vunpack.c.h.b16 %v1870
    %v2061 = vunpack.c.l.b16 %v1871
    %v2062 = vunpack.c.l.b16 %v1872
    %v2063 = vunpack.c.h.b16 %v1871
    %v2064 = vunpack.c.h.b16 %v1872
    %v2065 = vpack.c.b16 %v1938, %v1937
    %v2066 = vpack.c.b16 %v1940, %v1939
    %v2067 = vpack.c.b16 %v1942, %v1941
    %v2068 = vpack.c.b16 %v1944, %v1943
    %v2069 = vpack.c.b16 %v1946, %v1945
    %v2070 = vpack.c.b16 %v1948, %v1947
    %v2071 = vpack.c.b16 %v1950, %v1949
    %v2072 = vpack.c.b16 %v1952, %v1951
    %v2073 = vpack.c.b16 %v1954, %v1953
    %v2074 = vpack.c.b16 %v1956, %v1955
    %v2075 = vpack.c.b16 %v1958, %v1957
    %v2076 = vpack.c.b16 %v1960, %v1959
    %v2077 = vpack.c.b16 %v1962, %v1961
    %v2078 = vpack.c.b16 %v1964, %v1963
    %v2079 = vpack.c.b16 %v1966, %v1965
    %v2080 = vpack.c.b16 %v1968, %v1967
    %v2081 = vpack.c.b16 %v1970, %v1969
    %v2082 = vpack.c.b16 %v1972, %v1971
    %v2083 = vpack.c.b16 %v1974, %v1973
    %v2084 = vpack.c.b16 %v1976, %v1975
    %v2085 = vpack.c.b16 %v1978, %v1977
    %v2086 = vpack.c.b16 %v1980, %v1979
    %v2087 = vpack.c.b16 %v1982, %v1981
    %v2088 = vpack.c.b16 %v1984, %v1983
    %v2089 = vpack.c.b16 %v1986, %v1985
    %v2090 = vpack.c.b16 %v1988, %v1987
    %v2091 = vpack.c.b16 %v1990, %v1989
    %v2092 = vpack.c.b16 %v1992, %v1991
    %v2093 = vpack.c.b16 %v1994, %v1993
    %v2094 = vpack.c.b16 %v1996, %v1995
    %v2095 = vpack.c.b16 %v1998, %v1997
    %v2096 = vpack.c.b16 %v2000, %v1999
    %v2097 = vpack.c.b16 %v2002, %v2001
    %v2098 = vpack.c.b16 %v2004, %v2003
    %v2099 = vpack.c.b16 %v2006, %v2005
    %v2100 = vpack.c.b16 %v2008, %v2007
    %v2101 = vpack.c.b16 %v2010, %v2009
    %v2102 = vpack.c.b16 %v2012, %v2011
    %v2103 = vpack.c.b16 %v2014, %v2013
    %v2104 = vpack.c.b16 %v2016, %v2015
    %v2105 = vpack.c.b16 %v2018, %v2017
    %v2106 = vpack.c.b16 %v2020, %v2019
    %v2107 = vpack.c.b16 %v2022, %v2021
    %v2108 = vpack.c.b16 %v2024, %v2023
    %v2109 = vpack.c.b16 %v2026, %v2025
    %v2110 = vpack.c.b16 %v2028, %v2027
    %v2111 = vpack.c.b16 %v2030, %v2029
    %v2112 = vpack.c.b16 %v2032, %v2031
    %v2113 = vpack.c.b16 %v2034, %v2033
    %v2114 = vpack.c.b16 %v2036, %v2035
    %v2115 = vpack.c.b16 %v2038, %v2037
    %v2116 = vpack.c.b16 %v2040, %v2039
    %v2117 = vpack.c.b16 %v2042, %v2041
    %v2118 = vpack.c.b16 %v2044, %v2043
    %v2119 = vpack.c.b16 %v2046, %v2045
    %v2120 = vpack.c.b16 %v2048, %v2047
    %v2121 = vpack.c.b16 %v2050, %v2049
    %v2122 = vpack.c.b16 %v2052, %v2051
    %v2123 = vpack.c.b16 %v2054, %v2053
    %v2124 = vpack.c.b16 %v2056, %v2055
    %v2125 = vpack.c.b16 %v2058, %v2057
    %v2126 = vpack.c.b16 %v2060, %v2059
    %v2127 = vpack.c.b16 %v2062, %v2061
    %v2128 = vpack.c.b16 %v2064, %v2063
    %2193 = vst [vmem:[#allocation8] sm:$0xff] %v2065
    %2194 = vst [vmem:[#allocation8 + $0x8] sm:$0xff] %v2066
    %2195 = vst [vmem:[#allocation8 + $0x10] sm:$0xff] %v2067
    %2196 = vst [vmem:[#allocation8 + $0x18] sm:$0xff] %v2068
    %2197 = vst [vmem:[#allocation8 + $0x20] sm:$0xff] %v2069
    %2198 = vst [vmem:[#allocation8 + $0x28] sm:$0xff] %v2070
    %2199 = vst [vmem:[#allocation8 + $0x30] sm:$0xff] %v2071
    %2200 = vst [vmem:[#allocation8 + $0x38] sm:$0xff] %v2072
    %2201 = vst [vmem:[#allocation8 + $0x40] sm:$0xff] %v2073
    %2202 = vst [vmem:[#allocation8 + $0x48] sm:$0xff] %v2074
    %2203 = vst [vmem:[#allocation8 + $0x50] sm:$0xff] %v2075
    %2204 = vst [vmem:[#allocation8 + $0x58] sm:$0xff] %v2076
    %2205 = vst [vmem:[#allocation8 + $0x60] sm:$0xff] %v2077
    %2206 = vst [vmem:[#allocation8 + $0x68] sm:$0xff] %v2078
    %2207 = vst [vmem:[#allocation8 + $0x70] sm:$0xff] %v2079
    %2208 = vst [vmem:[#allocation8 + $0x78] sm:$0xff] %v2080
    %2209 = vst [vmem:[#allocation8 + $0x80] sm:$0xff] %v2081
    %2210 = vst [vmem:[#allocation8 + $0x88] sm:$0xff] %v2082
    %2211 = vst [vmem:[#allocation8 + $0x90] sm:$0xff] %v2083
    %2212 = vst [vmem:[#allocation8 + $0x98] sm:$0xff] %v2084
    %2213 = vst [vmem:[#allocation8 + $0xa0] sm:$0xff] %v2085
    %2214 = vst [vmem:[#allocation8 + $0xa8] sm:$0xff] %v2086
    %2215 = vst [vmem:[#allocation8 + $0xb0] sm:$0xff] %v2087
    %2216 = vst [vmem:[#allocation8 + $0xb8] sm:$0xff] %v2088
    %2217 = vst [vmem:[#allocation8 + $0xc0] sm:$0xff] %v2089
    %2218 = vst [vmem:[#allocation8 + $0xc8] sm:$0xff] %v2090
    %2219 = vst [vmem:[#allocation8 + $0xd0] sm:$0xff] %v2091
    %2220 = vst [vmem:[#allocation8 + $0xd8] sm:$0xff] %v2092
    %2221 = vst [vmem:[#allocation8 + $0xe0] sm:$0xff] %v2093
    %2222 = vst [vmem:[#allocation8 + $0xe8] sm:$0xff] %v2094
    %2223 = vst [vmem:[#allocation8 + $0xf0] sm:$0xff] %v2095
    %2224 = vst [vmem:[#allocation8 + $0xf8] sm:$0xff] %v2096
    %2225 = vst [vmem:[#allocation8 + $0x100] sm:$0xff] %v2097
    %2226 = vst [vmem:[#allocation8 + $0x108] sm:$0xff] %v2098
    %2227 = vst [vmem:[#allocation8 + $0x110] sm:$0xff] %v2099
    %2228 = vst [vmem:[#allocation8 + $0x118] sm:$0xff] %v2100
    %2229 = vst [vmem:[#allocation8 + $0x120] sm:$0xff] %v2101
    %2230 = vst [vmem:[#allocation8 + $0x128] sm:$0xff] %v2102
    %2231 = vst [vmem:[#allocation8 + $0x130] sm:$0xff] %v2103
    %2232 = vst [vmem:[#allocation8 + $0x138] sm:$0xff] %v2104
    %2233 = vst [vmem:[#allocation8 + $0x140] sm:$0xff] %v2105
    %2234 = vst [vmem:[#allocation8 + $0x148] sm:$0xff] %v2106
    %2235 = vst [vmem:[#allocation8 + $0x150] sm:$0xff] %v2107
    %2236 = vst [vmem:[#allocation8 + $0x158] sm:$0xff] %v2108
    %2237 = vst [vmem:[#allocation8 + $0x160] sm:$0xff] %v2109
    %2238 = vst [vmem:[#allocation8 + $0x168] sm:$0xff] %v2110
    %2239 = vst [vmem:[#allocation8 + $0x170] sm:$0xff] %v2111
    %2240 = vst [vmem:[#allocation8 + $0x178] sm:$0xff] %v2112
    %2241 = vst [vmem:[#allocation8 + $0x180] sm:$0xff] %v2113
    %2242 = vst [vmem:[#allocation8 + $0x188] sm:$0xff] %v2114
    %2243 = vst [vmem:[#allocation8 + $0x190] sm:$0xff] %v2115
    %2244 = vst [vmem:[#allocation8 + $0x198] sm:$0xff] %v2116
    %2245 = vst [vmem:[#allocation8 + $0x1a0] sm:$0xff] %v2117
    %2246 = vst [vmem:[#allocation8 + $0x1a8] sm:$0xff] %v2118
    %2247 = vst [vmem:[#allocation8 + $0x1b0] sm:$0xff] %v2119
    %2248 = vst [vmem:[#allocation8 + $0x1b8] sm:$0xff] %v2120
    %2249 = vst [vmem:[#allocation8 + $0x1c0] sm:$0xff] %v2121
    %2250 = vst [vmem:[#allocation8 + $0x1c8] sm:$0xff] %v2122
    %2251 = vst [vmem:[#allocation8 + $0x1d0] sm:$0xff] %v2123
    %2252 = vst [vmem:[#allocation8 + $0x1d8] sm:$0xff] %v2124
    %2253 = vst [vmem:[#allocation8 + $0x1e0] sm:$0xff] %v2125
    %2254 = vst [vmem:[#allocation8 + $0x1e8] sm:$0xff] %v2126
    %2255 = vst [vmem:[#allocation8 + $0x1f0] sm:$0xff] %v2127
    %2256 = vst [vmem:[#allocation8 + $0x1f8] sm:$0xff] %v2128
    // Predicated region
    $region26: #{tpu_custom_call.1} parent=1 // pred_check
      _
    $region27: #{tpu_custom_call.1} parent=1 // pred_check_branch
      %2258 = sbr.rel (0) target = $region29
    $region28: #{tpu_custom_call.1} parent=1 // pred_region
      %s2260 = ssub.s32 8192, 8192
      %2261 = vsyncadd [#allocation4], %s2260
      %s2262 = sshll.u32 [#allocation8], 4
      %s2263 = int_to_ptr.vmem [resolvable:$true] %s2262
      %2268 = dma.vmem_to_hbm [thread:$0]  %s2263, 8192, %s3, [#allocation4], 128, 128, 8
    $region29: #{tpu_custom_call.1} parent=1 // pred_fallthru
      _
    // Predicated region
    $region30: #{tpu_custom_call.1} parent=1 // pred_check
      _
    $region31: #{tpu_custom_call.1} parent=1 // pred_check_branch
      %2270 = sbr.rel (0) target = $region33
    $region32: #{tpu_custom_call.1} parent=1 // pred_region
      %2271 = dma.done [#allocation4], 8192
    $region33: #{tpu_custom_call.1} parent=1 // pred_fallthru
      _
    %2272 = vsyncpa [#allocation3], 1
    %2273 = vsyncpa [#allocation6], 1
    %2274 = vsyncpa [#allocation4], 1

</llo_original>
